<compile_context>
chip_gen: v7x
topology: tpu7x:2x2x1
jax: 0.10.0
libtpu: 0.0.40
codegen_flags: <defaults>
</compile_context>

<pallas_src>
import math

import jax
import jax.numpy as jnp
from jax.experimental import pallas as pl
from jax.experimental.pallas import tpu as pltpu

# ----------------------------- configuration (small demo sizes) -------------
NUM_JOINTS = 7
STATE_DIM = NUM_JOINTS + NUM_JOINTS * 3 + 3      # 31
ACTION_DIM = NUM_JOINTS                          # 7
INPUT_DIM = STATE_DIM + ACTION_DIM               # 38
HIDDEN = 32                                      # hidden_dim (small for demo)
NUM_HEADS = 4
NUM_LAYERS = 2
D_FF = HIDDEN * 4
LN_EPS = 1e-5                                    # nn.LayerNorm default eps
TILE_B_MAX = 256                                 # batch tile (f32 sublane-aligned)


def _round_up(x, m):
    return ((x + m - 1) // m) * m


# ----------------------------- Pallas kernel --------------------------------
def _layernorm(x, g, b):
    mu = jnp.mean(x, axis=-1, keepdims=True)
    d = x - mu                                   # reuse centered value
    var = jnp.mean(d * d, axis=-1, keepdims=True)
    return d * jax.lax.rsqrt(var + LN_EPS) * g + b


def critic_kernel(
    x_ref,                       # (TB, INPUT_DIM)
    wemb_ref, bemb_ref,          # (2, IN, H), (2, 1, H)   bias already includes PE row 0
    wattn_ref, battn_ref,        # (2, L, H, H), (2, L, 1, H)   folded Wv@Wo / bv@Wo+bo
    ln1g_ref, ln1b_ref,          # (2, L, 1, H)
    w1_ref, b1_ref,              # (2, L, H, 4H), (2, L, 1, 4H)
    w2_ref, b2_ref,              # (2, L, 4H, H), (2, L, 1, H)
    ln2g_ref, ln2b_ref,          # (2, L, 1, H)
    wout_ref, bout_ref,          # (2, H, 1), (2, 1, 1)
    q_ref,                       # out: (TB, 2)  -> [:,0]=Q1, [:,1]=Q2
):
    x = x_ref[...]
    qs = []
    for s in range(2):                           # two independent Q streams
        h = jnp.dot(x, wemb_ref[s],
                    preferred_element_type=jnp.float32) + bemb_ref[s]
        for l in range(NUM_LAYERS):
            # self-attention (seq_len == 1): exactly out(v(x)), pre-folded.
            attn = jnp.dot(h, wattn_ref[s, l],
                           preferred_element_type=jnp.float32) + battn_ref[s, l]
            h = _layernorm(h + attn, ln1g_ref[s, l], ln1b_ref[s, l])

            # feed-forward: relu(h @ W1 + b1) @ W2 + b2   (dropout = identity)
            ff = jnp.maximum(
                jnp.dot(h, w1_ref[s, l],
                        preferred_element_type=jnp.float32) + b1_ref[s, l],
                0.0)
            ff = jnp.dot(ff, w2_ref[s, l],
                         preferred_element_type=jnp.float32) + b2_ref[s, l]
            h = _layernorm(h + ff, ln2g_ref[s, l], ln2b_ref[s, l])

        qs.append(jnp.dot(h, wout_ref[s],
                          preferred_element_type=jnp.float32) + bout_ref[s])

    q_ref[...] = jnp.concatenate(qs, axis=-1)    # single (TB, 2) store


# ----------------------------- wrapper ---------------------------------------
_PARAM_ORDER = [
    "wemb", "bemb",
    "wattn", "battn",
    "ln1g", "ln1b",
    "w1", "b1", "w2", "b2",
    "ln2g", "ln2b",
    "wout", "bout",
]


def _resident_spec(arr):
    """Full-array, VMEM-resident BlockSpec (constant block index across grid)."""
    nd = arr.ndim
    return pl.BlockSpec(arr.shape, lambda i: (0,) * nd)


def transformer_critic_forward(state, action, kparams):
    B = state.shape[0]
    x = jnp.concatenate([state, action], axis=1).astype(jnp.float32)  # (B, IN)

    tile_b = min(TILE_B_MAX, _round_up(max(B, 1), 8))
    B_pad = _round_up(B, tile_b)
    if B_pad != B:
        x = jnp.pad(x, ((0, B_pad - B), (0, 0)))
    grid = (B_pad // tile_b,)

    flat = [kparams[name] for name in _PARAM_ORDER]
    in_specs = [pl.BlockSpec((tile_b, INPUT_DIM), lambda i: (i, 0))]
    in_specs += [_resident_spec(a) for a in flat]
    out_spec = pl.BlockSpec((tile_b, 2), lambda i: (i, 0))

    q = pl.pallas_call(
        critic_kernel,
        out_shape=jax.ShapeDtypeStruct((B_pad, 2), jnp.float32),
        grid=grid,
        in_specs=in_specs,
        out_specs=out_spec,
        compiler_params=pltpu.CompilerParams(
            dimension_semantics=("parallel",)),
    )(x, *flat)

    q = q[:B]
    return q[:, 0:1], q[:, 1:2]


# ----------------------------- parameter init (raw, PyTorch-style) ----------
def _linear(key, fan_in, fan_out):
    """nn.Linear default init: U(-1/sqrt(fan_in), 1/sqrt(fan_in)); W stored (in, out)."""
    kw, kb = jax.random.split(key)
    bound = 1.0 / math.sqrt(fan_in)
    W = jax.random.uniform(kw, (fan_in, fan_out), jnp.float32, -bound, bound)
    b = jax.random.uniform(kb, (1, fan_out), jnp.float32, -bound, bound)
    return W, b


def _positional_encoding_row0(d_model):
    # pe[0, 0::2] = sin(0 * div) = 0 ; pe[0, 1::2] = cos(0 * div) = 1
    position = jnp.float32(0.0)
    div_term = jnp.exp(
        jnp.arange(0, d_model, 2, dtype=jnp.float32) * (-math.log(10000.0) / d_model)
    )
    pe = jnp.zeros((d_model,), jnp.float32)
    pe = pe.at[0::2].set(jnp.sin(position * div_term))
    pe = pe.at[1::2].set(jnp.cos(position * div_term))
    return pe.reshape(1, d_model)


def init_raw_params(key):
    raw = {"pe0": _positional_encoding_row0(HIDDEN), "streams": {}}
    skeys = jax.random.split(key, 2)
    for name, sk in zip(("q1", "q2"), skeys):
        emb_k, head_k, layers_k = jax.random.split(sk, 3)
        d = {}
        d["wemb"], d["bemb"] = _linear(emb_k, INPUT_DIM, HIDDEN)
        d["wout"], d["bout"] = _linear(head_k, HIDDEN, 1)
        names = ("wq", "bq", "wk", "bk", "wv", "bv", "wo", "bo",
                 "w1", "b1", "w2", "b2", "ln1g", "ln1b", "ln2g", "ln2b")
        per = {n: [] for n in names}
        for lk in jax.random.split(layers_k, NUM_LAYERS):
            ks = jax.random.split(lk, 10)
            wq, bq = _linear(ks[0], HIDDEN, HIDDEN)
            wk, bk = _linear(ks[1], HIDDEN, HIDDEN)
            wv, bv = _linear(ks[2], HIDDEN, HIDDEN)
            wo, bo = _linear(ks[3], HIDDEN, HIDDEN)
            w1, b1 = _linear(ks[4], HIDDEN, D_FF)
            w2, b2 = _linear(ks[5], D_FF, HIDDEN)
            # LayerNorm params randomized (instead of ones/zeros) so the test
            # actually exercises the affine path; forward semantics unchanged.
            ln1g = 1.0 + 0.1 * jax.random.normal(ks[6], (1, HIDDEN), jnp.float32)
            ln1b = 0.1 * jax.random.normal(ks[7], (1, HIDDEN), jnp.float32)
            ln2g = 1.0 + 0.1 * jax.random.normal(ks[8], (1, HIDDEN), jnp.float32)
            ln2b = 0.1 * jax.random.normal(ks[9], (1, HIDDEN), jnp.float32)
            for k, v in dict(wq=wq, bq=bq, wk=wk, bk=bk, wv=wv, bv=bv, wo=wo,
                             bo=bo, w1=w1, b1=b1, w2=w2, b2=b2,
                             ln1g=ln1g, ln1b=ln1b, ln2g=ln2g, ln2b=ln2b).items():
                per[k].append(v)
        for k in per:
            d[k] = jnp.stack(per[k])             # (L, ...)
        raw["streams"][name] = d
    return raw


def prepare_kernel_params(raw):
    """Algebraic folding done once, in plain JAX, outside the kernel."""
    pe0 = raw["pe0"]

    def fold(d):
        # attn_out == x @ (Wv @ Wo) + (bv @ Wo + bo)   (exact for seq_len == 1)
        wattn = jnp.einsum("lij,ljk->lik", d["wv"], d["wo"])
        battn = jnp.einsum("lij,ljk->lik", d["bv"], d["wo"]) + d["bo"]
        return dict(
            wemb=d["wemb"], bemb=d["bemb"] + pe0,           # PE row 0 folded in
            wattn=wattn, battn=battn,
            ln1g=d["ln1g"], ln1b=d["ln1b"],
            w1=d["w1"], b1=d["b1"], w2=d["w2"], b2=d["b2"],
            ln2g=d["ln2g"], ln2b=d["ln2b"],
            wout=d["wout"], bout=d["bout"],
        )

    f1 = fold(raw["streams"]["q1"])
    f2 = fold(raw["streams"]["q2"])
    return {k: jnp.stack([f1[k], f2[k]]) for k in _PARAM_ORDER}


# ----------------------------- pure-JAX reference (faithful, unfolded) ------
def reference_forward(state, action, raw):
    x = jnp.concatenate([state, action], axis=1).astype(jnp.float32)
    xs = x[:, None, :]                                       # (B, 1, IN)
    pe0 = raw["pe0"]

    def ln(x, g, b):
        mu = jnp.mean(x, axis=-1, keepdims=True)
        var = jnp.mean((x - mu) ** 2, axis=-1, keepdims=True)
        return (x - mu) / jnp.sqrt(var + LN_EPS) * g + b

    def mha(h, wq, bq, wk, bk, wv, bv, wo, bo):
        B, S, H = h.shape
        dk = H // NUM_HEADS
        q = (h @ wq + bq).reshape(B, S, NUM_HEADS, dk).transpose(0, 2, 1, 3)
        k = (h @ wk + bk).reshape(B, S, NUM_HEADS, dk).transpose(0, 2, 1, 3)
        v = (h @ wv + bv).reshape(B, S, NUM_HEADS, dk).transpose(0, 2, 1, 3)
        scores = q @ jnp.swapaxes(k, -1, -2) / math.sqrt(dk)
        attn = jax.nn.softmax(scores, axis=-1)
        out = (attn @ v).transpose(0, 2, 1, 3).reshape(B, S, H)
        return out @ wo + bo

    def stream(d):
        h = xs @ d["wemb"] + d["bemb"] + pe0
        for l in range(NUM_LAYERS):
            a = mha(h, d["wq"][l], d["bq"][l], d["wk"][l], d["bk"][l],
                    d["wv"][l], d["bv"][l], d["wo"][l], d["bo"][l])
            h = ln(h + a, d["ln1g"][l], d["ln1b"][l])
            ff = (jnp.maximum(h @ d["w1"][l] + d["b1"][l], 0.0)
                  @ d["w2"][l] + d["b2"][l])
            h = ln(h + ff, d["ln2g"][l], d["ln2b"][l])
        return h[:, -1] @ d["wout"] + d["bout"]              # (B, 1)

    return stream(raw["streams"]["q1"]), stream(raw["streams"]["q2"])


# ----------------------------- main ------------------------------------------
if __name__ == "__main__":
    key = jax.random.PRNGKey(0)
    k_in, k_par = jax.random.split(key)
    ks, ka = jax.random.split(k_in)

    B = 2
    state = jax.random.normal(ks, (B, STATE_DIM), jnp.float32)
    action = jax.random.uniform(ka, (B, ACTION_DIM), jnp.float32, -1.0, 1.0)

    raw = init_raw_params(k_par)
    kparams = prepare_kernel_params(raw)

    q1, q2 = transformer_critic_forward(state, action, kparams)
    jax.block_until_ready((q1, q2))

    q1_ref, q2_ref = reference_forward(state, action, raw)
    assert q1.shape == (B, 1) and q2.shape == (B, 1)
    assert jnp.allclose(q1, q1_ref, atol=1e-4, rtol=1e-3), (q1, q1_ref)
    assert jnp.allclose(q2, q2_ref, atol=1e-4, rtol=1e-3), (q2, q2_ref)

    # TODO(synk): dropout layers are identity (eval semantics); training-mode
    # stochastic dropout is not implemented in the kernel.
    print("KERNEL_OK")
</pallas_src>

<mosaic_0001>
module attributes {stable_mosaic.version = 11 : i64} {
  func.func @critic_kernel(%arg0: i32, %arg1: memref<8x38xf32, #tpu.memory_space<vmem>>, %arg2: memref<2x38x32xf32, #tpu.memory_space<vmem>>, %arg3: memref<2x1x32xf32, #tpu.memory_space<vmem>>, %arg4: memref<2x2x32x32xf32, #tpu.memory_space<vmem>>, %arg5: memref<2x2x1x32xf32, #tpu.memory_space<vmem>>, %arg6: memref<2x2x1x32xf32, #tpu.memory_space<vmem>>, %arg7: memref<2x2x1x32xf32, #tpu.memory_space<vmem>>, %arg8: memref<2x2x32x128xf32, #tpu.memory_space<vmem>>, %arg9: memref<2x2x1x128xf32, #tpu.memory_space<vmem>>, %arg10: memref<2x2x128x32xf32, #tpu.memory_space<vmem>>, %arg11: memref<2x2x1x32xf32, #tpu.memory_space<vmem>>, %arg12: memref<2x2x1x32xf32, #tpu.memory_space<vmem>>, %arg13: memref<2x2x1x32xf32, #tpu.memory_space<vmem>>, %arg14: memref<2x32x1xf32, #tpu.memory_space<vmem>>, %arg15: memref<2x1x1xf32, #tpu.memory_space<vmem>>, %arg16: memref<8x2xf32, #tpu.memory_space<vmem>>) attributes {dimension_semantics = [#tpu.dimension_semantics<parallel>], iteration_bounds = array<i64: 1>, scalar_prefetch = 0 : i64, scratch_operands = 0 : i64, tpu.core_type = #tpu.core_type<tc>, window_params = [{transform_indices = @transform_0, window_bounds = array<i64: 8, 38>}, {pipeline_mode = #tpu.pipeline_mode<synchronous>, transform_indices = @transform_1, window_bounds = array<i64: 2, 38, 32>}, {pipeline_mode = #tpu.pipeline_mode<synchronous>, transform_indices = @transform_2, window_bounds = array<i64: 2, 1, 32>}, {pipeline_mode = #tpu.pipeline_mode<synchronous>, transform_indices = @transform_3, window_bounds = array<i64: 2, 2, 32, 32>}, {pipeline_mode = #tpu.pipeline_mode<synchronous>, transform_indices = @transform_4, window_bounds = array<i64: 2, 2, 1, 32>}, {pipeline_mode = #tpu.pipeline_mode<synchronous>, transform_indices = @transform_5, window_bounds = array<i64: 2, 2, 1, 32>}, {pipeline_mode = #tpu.pipeline_mode<synchronous>, transform_indices = @transform_6, window_bounds = array<i64: 2, 2, 1, 32>}, {pipeline_mode = #tpu.pipeline_mode<synchronous>, transform_indices = @transform_7, window_bounds = array<i64: 2, 2, 32, 128>}, {pipeline_mode = #tpu.pipeline_mode<synchronous>, transform_indices = @transform_8, window_bounds = array<i64: 2, 2, 1, 128>}, {pipeline_mode = #tpu.pipeline_mode<synchronous>, transform_indices = @transform_9, window_bounds = array<i64: 2, 2, 128, 32>}, {pipeline_mode = #tpu.pipeline_mode<synchronous>, transform_indices = @transform_10, window_bounds = array<i64: 2, 2, 1, 32>}, {pipeline_mode = #tpu.pipeline_mode<synchronous>, transform_indices = @transform_11, window_bounds = array<i64: 2, 2, 1, 32>}, {pipeline_mode = #tpu.pipeline_mode<synchronous>, transform_indices = @transform_12, window_bounds = array<i64: 2, 2, 1, 32>}, {pipeline_mode = #tpu.pipeline_mode<synchronous>, transform_indices = @transform_13, window_bounds = array<i64: 2, 32, 1>}, {pipeline_mode = #tpu.pipeline_mode<synchronous>, transform_indices = @transform_14, window_bounds = array<i64: 2, 1, 1>}, {transform_indices = @transform_15, window_bounds = array<i64: 8, 2>}]} {
    %c0 = arith.constant 0 : index
    %c0_0 = arith.constant 0 : index
    %0 = vector.load %arg1[%c0, %c0_0] : memref<8x38xf32, #tpu.memory_space<vmem>>, vector<8x38xf32>
    %c0_1 = arith.constant 0 : index
    %c0_2 = arith.constant 0 : index
    %c0_3 = arith.constant 0 : index
    %1 = vector.load %arg2[%c0_1, %c0_2, %c0_3] : memref<2x38x32xf32, #tpu.memory_space<vmem>>, vector<1x38x32xf32>
    %2 = vector.shape_cast %1 : vector<1x38x32xf32> to vector<38x32xf32>
    %cst = arith.constant dense<0.000000e+00> : vector<8x32xf32>
    %3 = tpu.matmul %0, %2, %cst {dimension_numbers = #tpu.dot_dimension_numbers<[1], [0], [0], [1], [0, 0, 1, 1], [], []>} : vector<8x38xf32>, vector<38x32xf32>, vector<8x32xf32> -> vector<8x32xf32>
    %c0_4 = arith.constant 0 : index
    %c0_5 = arith.constant 0 : index
    %c0_6 = arith.constant 0 : index
    %4 = vector.load %arg3[%c0_4, %c0_5, %c0_6] : memref<2x1x32xf32, #tpu.memory_space<vmem>>, vector<1x1x32xf32>
    %5 = vector.shape_cast %4 : vector<1x1x32xf32> to vector<1x32xf32>
    %6 = vector.broadcast %5 : vector<1x32xf32> to vector<8x32xf32>
    %7 = arith.addf %3, %6 : vector<8x32xf32>
    %c0_7 = arith.constant 0 : index
    %c0_8 = arith.constant 0 : index
    %c0_9 = arith.constant 0 : index
    %c0_10 = arith.constant 0 : index
    %8 = vector.load %arg4[%c0_7, %c0_8, %c0_9, %c0_10] : memref<2x2x32x32xf32, #tpu.memory_space<vmem>>, vector<1x1x32x32xf32>
    %9 = vector.shape_cast %8 : vector<1x1x32x32xf32> to vector<32x32xf32>
    %cst_11 = arith.constant dense<0.000000e+00> : vector<8x32xf32>
    %10 = tpu.matmul %7, %9, %cst_11 {dimension_numbers = #tpu.dot_dimension_numbers<[1], [0], [0], [1], [0, 0, 1, 1], [], []>} : vector<8x32xf32>, vector<32x32xf32>, vector<8x32xf32> -> vector<8x32xf32>
    %c0_12 = arith.constant 0 : index
    %c0_13 = arith.constant 0 : index
    %c0_14 = arith.constant 0 : index
    %c0_15 = arith.constant 0 : index
    %11 = vector.load %arg5[%c0_12, %c0_13, %c0_14, %c0_15] : memref<2x2x1x32xf32, #tpu.memory_space<vmem>>, vector<1x1x1x32xf32>
    %12 = vector.shape_cast %11 : vector<1x1x1x32xf32> to vector<1x32xf32>
    %13 = vector.broadcast %12 : vector<1x32xf32> to vector<8x32xf32>
    %14 = arith.addf %10, %13 : vector<8x32xf32>
    %15 = arith.addf %7, %14 : vector<8x32xf32>
    %c0_16 = arith.constant 0 : index
    %c0_17 = arith.constant 0 : index
    %c0_18 = arith.constant 0 : index
    %c0_19 = arith.constant 0 : index
    %16 = vector.load %arg6[%c0_16, %c0_17, %c0_18, %c0_19] : memref<2x2x1x32xf32, #tpu.memory_space<vmem>>, vector<1x1x1x32xf32>
    %17 = vector.shape_cast %16 : vector<1x1x1x32xf32> to vector<1x32xf32>
    %c0_20 = arith.constant 0 : index
    %c0_21 = arith.constant 0 : index
    %c0_22 = arith.constant 0 : index
    %c0_23 = arith.constant 0 : index
    %18 = vector.load %arg7[%c0_20, %c0_21, %c0_22, %c0_23] : memref<2x2x1x32xf32, #tpu.memory_space<vmem>>, vector<1x1x1x32xf32>
    %19 = vector.shape_cast %18 : vector<1x1x1x32xf32> to vector<1x32xf32>
    %cst_24 = arith.constant dense<0.000000e+00> : vector<8xf32>
    %20 = vector.multi_reduction <add>, %15, %cst_24 [1] : vector<8x32xf32> to vector<8xf32>
    %21 = vector.shape_cast %20 : vector<8xf32> to vector<8x1xf32>
    %cst_25 = arith.constant 3.200000e+01 : f32
    %22 = vector.broadcast %cst_25 : f32 to vector<8x1xf32>
    %23 = arith.divf %21, %22 : vector<8x1xf32>
    %24 = vector.broadcast %23 : vector<8x1xf32> to vector<8x32xf32>
    %25 = arith.subf %15, %24 : vector<8x32xf32>
    %26 = arith.mulf %25, %25 : vector<8x32xf32>
    %cst_26 = arith.constant dense<0.000000e+00> : vector<8xf32>
    %27 = vector.multi_reduction <add>, %26, %cst_26 [1] : vector<8x32xf32> to vector<8xf32>
    %28 = vector.shape_cast %27 : vector<8xf32> to vector<8x1xf32>
    %cst_27 = arith.constant 3.200000e+01 : f32
    %29 = vector.broadcast %cst_27 : f32 to vector<8x1xf32>
    %30 = arith.divf %28, %29 : vector<8x1xf32>
    %cst_28 = arith.constant 9.99999974E-6 : f32
    %31 = vector.broadcast %cst_28 : f32 to vector<8x1xf32>
    %32 = arith.addf %30, %31 : vector<8x1xf32>
    %33 = math.rsqrt %32 : vector<8x1xf32>
    %34 = vector.broadcast %33 : vector<8x1xf32> to vector<8x32xf32>
    %35 = arith.mulf %25, %34 : vector<8x32xf32>
    %36 = vector.broadcast %17 : vector<1x32xf32> to vector<8x32xf32>
    %37 = arith.mulf %35, %36 : vector<8x32xf32>
    %38 = vector.broadcast %19 : vector<1x32xf32> to vector<8x32xf32>
    %39 = arith.addf %37, %38 : vector<8x32xf32>
    %c0_29 = arith.constant 0 : index
    %c0_30 = arith.constant 0 : index
    %c0_31 = arith.constant 0 : index
    %c0_32 = arith.constant 0 : index
    %40 = vector.load %arg8[%c0_29, %c0_30, %c0_31, %c0_32] : memref<2x2x32x128xf32, #tpu.memory_space<vmem>>, vector<1x1x32x128xf32>
    %41 = vector.shape_cast %40 : vector<1x1x32x128xf32> to vector<32x128xf32>
    %cst_33 = arith.constant dense<0.000000e+00> : vector<8x128xf32>
    %42 = tpu.matmul %39, %41, %cst_33 {dimension_numbers = #tpu.dot_dimension_numbers<[1], [0], [0], [1], [0, 0, 1, 1], [], []>} : vector<8x32xf32>, vector<32x128xf32>, vector<8x128xf32> -> vector<8x128xf32>
    %c0_34 = arith.constant 0 : index
    %c0_35 = arith.constant 0 : index
    %c0_36 = arith.constant 0 : index
    %c0_37 = arith.constant 0 : index
    %43 = vector.load %arg9[%c0_34, %c0_35, %c0_36, %c0_37] : memref<2x2x1x128xf32, #tpu.memory_space<vmem>>, vector<1x1x1x128xf32>
    %44 = vector.shape_cast %43 : vector<1x1x1x128xf32> to vector<1x128xf32>
    %45 = vector.broadcast %44 : vector<1x128xf32> to vector<8x128xf32>
    %46 = arith.addf %42, %45 : vector<8x128xf32>
    %cst_38 = arith.constant 0.000000e+00 : f32
    %47 = vector.broadcast %cst_38 : f32 to vector<8x128xf32>
    %48 = arith.maximumf %46, %47 : vector<8x128xf32>
    %c0_39 = arith.constant 0 : index
    %c0_40 = arith.constant 0 : index
    %c0_41 = arith.constant 0 : index
    %c0_42 = arith.constant 0 : index
    %49 = vector.load %arg10[%c0_39, %c0_40, %c0_41, %c0_42] : memref<2x2x128x32xf32, #tpu.memory_space<vmem>>, vector<1x1x128x32xf32>
    %50 = vector.shape_cast %49 : vector<1x1x128x32xf32> to vector<128x32xf32>
    %cst_43 = arith.constant dense<0.000000e+00> : vector<8x32xf32>
    %51 = tpu.matmul %48, %50, %cst_43 {dimension_numbers = #tpu.dot_dimension_numbers<[1], [0], [0], [1], [0, 0, 1, 1], [], []>} : vector<8x128xf32>, vector<128x32xf32>, vector<8x32xf32> -> vector<8x32xf32>
    %c0_44 = arith.constant 0 : index
    %c0_45 = arith.constant 0 : index
    %c0_46 = arith.constant 0 : index
    %c0_47 = arith.constant 0 : index
    %52 = vector.load %arg11[%c0_44, %c0_45, %c0_46, %c0_47] : memref<2x2x1x32xf32, #tpu.memory_space<vmem>>, vector<1x1x1x32xf32>
    %53 = vector.shape_cast %52 : vector<1x1x1x32xf32> to vector<1x32xf32>
    %54 = vector.broadcast %53 : vector<1x32xf32> to vector<8x32xf32>
    %55 = arith.addf %51, %54 : vector<8x32xf32>
    %56 = arith.addf %39, %55 : vector<8x32xf32>
    %c0_48 = arith.constant 0 : index
    %c0_49 = arith.constant 0 : index
    %c0_50 = arith.constant 0 : index
    %c0_51 = arith.constant 0 : index
    %57 = vector.load %arg12[%c0_48, %c0_49, %c0_50, %c0_51] : memref<2x2x1x32xf32, #tpu.memory_space<vmem>>, vector<1x1x1x32xf32>
    %58 = vector.shape_cast %57 : vector<1x1x1x32xf32> to vector<1x32xf32>
    %c0_52 = arith.constant 0 : index
    %c0_53 = arith.constant 0 : index
    %c0_54 = arith.constant 0 : index
    %c0_55 = arith.constant 0 : index
    %59 = vector.load %arg13[%c0_52, %c0_53, %c0_54, %c0_55] : memref<2x2x1x32xf32, #tpu.memory_space<vmem>>, vector<1x1x1x32xf32>
    %60 = vector.shape_cast %59 : vector<1x1x1x32xf32> to vector<1x32xf32>
    %cst_56 = arith.constant dense<0.000000e+00> : vector<8xf32>
    %61 = vector.multi_reduction <add>, %56, %cst_56 [1] : vector<8x32xf32> to vector<8xf32>
    %62 = vector.shape_cast %61 : vector<8xf32> to vector<8x1xf32>
    %cst_57 = arith.constant 3.200000e+01 : f32
    %63 = vector.broadcast %cst_57 : f32 to vector<8x1xf32>
    %64 = arith.divf %62, %63 : vector<8x1xf32>
    %65 = vector.broadcast %64 : vector<8x1xf32> to vector<8x32xf32>
    %66 = arith.subf %56, %65 : vector<8x32xf32>
    %67 = arith.mulf %66, %66 : vector<8x32xf32>
    %cst_58 = arith.constant dense<0.000000e+00> : vector<8xf32>
    %68 = vector.multi_reduction <add>, %67, %cst_58 [1] : vector<8x32xf32> to vector<8xf32>
    %69 = vector.shape_cast %68 : vector<8xf32> to vector<8x1xf32>
    %cst_59 = arith.constant 3.200000e+01 : f32
    %70 = vector.broadcast %cst_59 : f32 to vector<8x1xf32>
    %71 = arith.divf %69, %70 : vector<8x1xf32>
    %cst_60 = arith.constant 9.99999974E-6 : f32
    %72 = vector.broadcast %cst_60 : f32 to vector<8x1xf32>
    %73 = arith.addf %71, %72 : vector<8x1xf32>
    %74 = math.rsqrt %73 : vector<8x1xf32>
    %75 = vector.broadcast %74 : vector<8x1xf32> to vector<8x32xf32>
    %76 = arith.mulf %66, %75 : vector<8x32xf32>
    %77 = vector.broadcast %58 : vector<1x32xf32> to vector<8x32xf32>
    %78 = arith.mulf %76, %77 : vector<8x32xf32>
    %79 = vector.broadcast %60 : vector<1x32xf32> to vector<8x32xf32>
    %80 = arith.addf %78, %79 : vector<8x32xf32>
    %c0_61 = arith.constant 0 : index
    %c1 = arith.constant 1 : index
    %c0_62 = arith.constant 0 : index
    %c0_63 = arith.constant 0 : index
    %81 = vector.load %arg4[%c0_61, %c1, %c0_62, %c0_63] : memref<2x2x32x32xf32, #tpu.memory_space<vmem>>, vector<1x1x32x32xf32>
    %82 = vector.shape_cast %81 : vector<1x1x32x32xf32> to vector<32x32xf32>
    %cst_64 = arith.constant dense<0.000000e+00> : vector<8x32xf32>
    %83 = tpu.matmul %80, %82, %cst_64 {dimension_numbers = #tpu.dot_dimension_numbers<[1], [0], [0], [1], [0, 0, 1, 1], [], []>} : vector<8x32xf32>, vector<32x32xf32>, vector<8x32xf32> -> vector<8x32xf32>
    %c0_65 = arith.constant 0 : index
    %c1_66 = arith.constant 1 : index
    %c0_67 = arith.constant 0 : index
    %c0_68 = arith.constant 0 : index
    %84 = vector.load %arg5[%c0_65, %c1_66, %c0_67, %c0_68] : memref<2x2x1x32xf32, #tpu.memory_space<vmem>>, vector<1x1x1x32xf32>
    %85 = vector.shape_cast %84 : vector<1x1x1x32xf32> to vector<1x32xf32>
    %86 = vector.broadcast %85 : vector<1x32xf32> to vector<8x32xf32>
    %87 = arith.addf %83, %86 : vector<8x32xf32>
    %88 = arith.addf %80, %87 : vector<8x32xf32>
    %c0_69 = arith.constant 0 : index
    %c1_70 = arith.constant 1 : index
    %c0_71 = arith.constant 0 : index
    %c0_72 = arith.constant 0 : index
    %89 = vector.load %arg6[%c0_69, %c1_70, %c0_71, %c0_72] : memref<2x2x1x32xf32, #tpu.memory_space<vmem>>, vector<1x1x1x32xf32>
    %90 = vector.shape_cast %89 : vector<1x1x1x32xf32> to vector<1x32xf32>
    %c0_73 = arith.constant 0 : index
    %c1_74 = arith.constant 1 : index
    %c0_75 = arith.constant 0 : index
    %c0_76 = arith.constant 0 : index
    %91 = vector.load %arg7[%c0_73, %c1_74, %c0_75, %c0_76] : memref<2x2x1x32xf32, #tpu.memory_space<vmem>>, vector<1x1x1x32xf32>
    %92 = vector.shape_cast %91 : vector<1x1x1x32xf32> to vector<1x32xf32>
    %cst_77 = arith.constant dense<0.000000e+00> : vector<8xf32>
    %93 = vector.multi_reduction <add>, %88, %cst_77 [1] : vector<8x32xf32> to vector<8xf32>
    %94 = vector.shape_cast %93 : vector<8xf32> to vector<8x1xf32>
    %cst_78 = arith.constant 3.200000e+01 : f32
    %95 = vector.broadcast %cst_78 : f32 to vector<8x1xf32>
    %96 = arith.divf %94, %95 : vector<8x1xf32>
    %97 = vector.broadcast %96 : vector<8x1xf32> to vector<8x32xf32>
    %98 = arith.subf %88, %97 : vector<8x32xf32>
    %99 = arith.mulf %98, %98 : vector<8x32xf32>
    %cst_79 = arith.constant dense<0.000000e+00> : vector<8xf32>
    %100 = vector.multi_reduction <add>, %99, %cst_79 [1] : vector<8x32xf32> to vector<8xf32>
    %101 = vector.shape_cast %100 : vector<8xf32> to vector<8x1xf32>
    %cst_80 = arith.constant 3.200000e+01 : f32
    %102 = vector.broadcast %cst_80 : f32 to vector<8x1xf32>
    %103 = arith.divf %101, %102 : vector<8x1xf32>
    %cst_81 = arith.constant 9.99999974E-6 : f32
    %104 = vector.broadcast %cst_81 : f32 to vector<8x1xf32>
    %105 = arith.addf %103, %104 : vector<8x1xf32>
    %106 = math.rsqrt %105 : vector<8x1xf32>
    %107 = vector.broadcast %106 : vector<8x1xf32> to vector<8x32xf32>
    %108 = arith.mulf %98, %107 : vector<8x32xf32>
    %109 = vector.broadcast %90 : vector<1x32xf32> to vector<8x32xf32>
    %110 = arith.mulf %108, %109 : vector<8x32xf32>
    %111 = vector.broadcast %92 : vector<1x32xf32> to vector<8x32xf32>
    %112 = arith.addf %110, %111 : vector<8x32xf32>
    %c0_82 = arith.constant 0 : index
    %c1_83 = arith.constant 1 : index
    %c0_84 = arith.constant 0 : index
    %c0_85 = arith.constant 0 : index
    %113 = vector.load %arg8[%c0_82, %c1_83, %c0_84, %c0_85] : memref<2x2x32x128xf32, #tpu.memory_space<vmem>>, vector<1x1x32x128xf32>
    %114 = vector.shape_cast %113 : vector<1x1x32x128xf32> to vector<32x128xf32>
    %cst_86 = arith.constant dense<0.000000e+00> : vector<8x128xf32>
    %115 = tpu.matmul %112, %114, %cst_86 {dimension_numbers = #tpu.dot_dimension_numbers<[1], [0], [0], [1], [0, 0, 1, 1], [], []>} : vector<8x32xf32>, vector<32x128xf32>, vector<8x128xf32> -> vector<8x128xf32>
    %c0_87 = arith.constant 0 : index
    %c1_88 = arith.constant 1 : index
    %c0_89 = arith.constant 0 : index
    %c0_90 = arith.constant 0 : index
    %116 = vector.load %arg9[%c0_87, %c1_88, %c0_89, %c0_90] : memref<2x2x1x128xf32, #tpu.memory_space<vmem>>, vector<1x1x1x128xf32>
    %117 = vector.shape_cast %116 : vector<1x1x1x128xf32> to vector<1x128xf32>
    %118 = vector.broadcast %117 : vector<1x128xf32> to vector<8x128xf32>
    %119 = arith.addf %115, %118 : vector<8x128xf32>
    %cst_91 = arith.constant 0.000000e+00 : f32
    %120 = vector.broadcast %cst_91 : f32 to vector<8x128xf32>
    %121 = arith.maximumf %119, %120 : vector<8x128xf32>
    %c0_92 = arith.constant 0 : index
    %c1_93 = arith.constant 1 : index
    %c0_94 = arith.constant 0 : index
    %c0_95 = arith.constant 0 : index
    %122 = vector.load %arg10[%c0_92, %c1_93, %c0_94, %c0_95] : memref<2x2x128x32xf32, #tpu.memory_space<vmem>>, vector<1x1x128x32xf32>
    %123 = vector.shape_cast %122 : vector<1x1x128x32xf32> to vector<128x32xf32>
    %cst_96 = arith.constant dense<0.000000e+00> : vector<8x32xf32>
    %124 = tpu.matmul %121, %123, %cst_96 {dimension_numbers = #tpu.dot_dimension_numbers<[1], [0], [0], [1], [0, 0, 1, 1], [], []>} : vector<8x128xf32>, vector<128x32xf32>, vector<8x32xf32> -> vector<8x32xf32>
    %c0_97 = arith.constant 0 : index
    %c1_98 = arith.constant 1 : index
    %c0_99 = arith.constant 0 : index
    %c0_100 = arith.constant 0 : index
    %125 = vector.load %arg11[%c0_97, %c1_98, %c0_99, %c0_100] : memref<2x2x1x32xf32, #tpu.memory_space<vmem>>, vector<1x1x1x32xf32>
    %126 = vector.shape_cast %125 : vector<1x1x1x32xf32> to vector<1x32xf32>
    %127 = vector.broadcast %126 : vector<1x32xf32> to vector<8x32xf32>
    %128 = arith.addf %124, %127 : vector<8x32xf32>
    %129 = arith.addf %112, %128 : vector<8x32xf32>
    %c0_101 = arith.constant 0 : index
    %c1_102 = arith.constant 1 : index
    %c0_103 = arith.constant 0 : index
    %c0_104 = arith.constant 0 : index
    %130 = vector.load %arg12[%c0_101, %c1_102, %c0_103, %c0_104] : memref<2x2x1x32xf32, #tpu.memory_space<vmem>>, vector<1x1x1x32xf32>
    %131 = vector.shape_cast %130 : vector<1x1x1x32xf32> to vector<1x32xf32>
    %c0_105 = arith.constant 0 : index
    %c1_106 = arith.constant 1 : index
    %c0_107 = arith.constant 0 : index
    %c0_108 = arith.constant 0 : index
    %132 = vector.load %arg13[%c0_105, %c1_106, %c0_107, %c0_108] : memref<2x2x1x32xf32, #tpu.memory_space<vmem>>, vector<1x1x1x32xf32>
    %133 = vector.shape_cast %132 : vector<1x1x1x32xf32> to vector<1x32xf32>
    %cst_109 = arith.constant dense<0.000000e+00> : vector<8xf32>
    %134 = vector.multi_reduction <add>, %129, %cst_109 [1] : vector<8x32xf32> to vector<8xf32>
    %135 = vector.shape_cast %134 : vector<8xf32> to vector<8x1xf32>
    %cst_110 = arith.constant 3.200000e+01 : f32
    %136 = vector.broadcast %cst_110 : f32 to vector<8x1xf32>
    %137 = arith.divf %135, %136 : vector<8x1xf32>
    %138 = vector.broadcast %137 : vector<8x1xf32> to vector<8x32xf32>
    %139 = arith.subf %129, %138 : vector<8x32xf32>
    %140 = arith.mulf %139, %139 : vector<8x32xf32>
    %cst_111 = arith.constant dense<0.000000e+00> : vector<8xf32>
    %141 = vector.multi_reduction <add>, %140, %cst_111 [1] : vector<8x32xf32> to vector<8xf32>
    %142 = vector.shape_cast %141 : vector<8xf32> to vector<8x1xf32>
    %cst_112 = arith.constant 3.200000e+01 : f32
    %143 = vector.broadcast %cst_112 : f32 to vector<8x1xf32>
    %144 = arith.divf %142, %143 : vector<8x1xf32>
    %cst_113 = arith.constant 9.99999974E-6 : f32
    %145 = vector.broadcast %cst_113 : f32 to vector<8x1xf32>
    %146 = arith.addf %144, %145 : vector<8x1xf32>
    %147 = math.rsqrt %146 : vector<8x1xf32>
    %148 = vector.broadcast %147 : vector<8x1xf32> to vector<8x32xf32>
    %149 = arith.mulf %139, %148 : vector<8x32xf32>
    %150 = vector.broadcast %131 : vector<1x32xf32> to vector<8x32xf32>
    %151 = arith.mulf %149, %150 : vector<8x32xf32>
    %152 = vector.broadcast %133 : vector<1x32xf32> to vector<8x32xf32>
    %153 = arith.addf %151, %152 : vector<8x32xf32>
    %c0_114 = arith.constant 0 : index
    %c0_115 = arith.constant 0 : index
    %c0_116 = arith.constant 0 : index
    %154 = vector.load %arg14[%c0_114, %c0_115, %c0_116] : memref<2x32x1xf32, #tpu.memory_space<vmem>>, vector<1x32x1xf32>
    %155 = vector.shape_cast %154 : vector<1x32x1xf32> to vector<32x1xf32>
    %cst_117 = arith.constant dense<0.000000e+00> : vector<8x1xf32>
    %156 = tpu.matmul %153, %155, %cst_117 {dimension_numbers = #tpu.dot_dimension_numbers<[1], [0], [0], [1], [0, 0, 1, 1], [], []>} : vector<8x32xf32>, vector<32x1xf32>, vector<8x1xf32> -> vector<8x1xf32>
    %c0_118 = arith.constant 0 : index
    %c0_119 = arith.constant 0 : index
    %c0_120 = arith.constant 0 : index
    %157 = vector.load %arg15[%c0_118, %c0_119, %c0_120] : memref<2x1x1xf32, #tpu.memory_space<vmem>>, vector<1x1x1xf32>
    %158 = vector.shape_cast %157 : vector<1x1x1xf32> to vector<1x1xf32>
    %159 = vector.broadcast %158 : vector<1x1xf32> to vector<8x1xf32>
    %160 = arith.addf %156, %159 : vector<8x1xf32>
    %c1_121 = arith.constant 1 : index
    %c0_122 = arith.constant 0 : index
    %c0_123 = arith.constant 0 : index
    %161 = vector.load %arg2[%c1_121, %c0_122, %c0_123] : memref<2x38x32xf32, #tpu.memory_space<vmem>>, vector<1x38x32xf32>
    %162 = vector.shape_cast %161 : vector<1x38x32xf32> to vector<38x32xf32>
    %cst_124 = arith.constant dense<0.000000e+00> : vector<8x32xf32>
    %163 = tpu.matmul %0, %162, %cst_124 {dimension_numbers = #tpu.dot_dimension_numbers<[1], [0], [0], [1], [0, 0, 1, 1], [], []>} : vector<8x38xf32>, vector<38x32xf32>, vector<8x32xf32> -> vector<8x32xf32>
    %c1_125 = arith.constant 1 : index
    %c0_126 = arith.constant 0 : index
    %c0_127 = arith.constant 0 : index
    %164 = vector.load %arg3[%c1_125, %c0_126, %c0_127] : memref<2x1x32xf32, #tpu.memory_space<vmem>>, vector<1x1x32xf32>
    %165 = vector.shape_cast %164 : vector<1x1x32xf32> to vector<1x32xf32>
    %166 = vector.broadcast %165 : vector<1x32xf32> to vector<8x32xf32>
    %167 = arith.addf %163, %166 : vector<8x32xf32>
    %c1_128 = arith.constant 1 : index
    %c0_129 = arith.constant 0 : index
    %c0_130 = arith.constant 0 : index
    %c0_131 = arith.constant 0 : index
    %168 = vector.load %arg4[%c1_128, %c0_129, %c0_130, %c0_131] : memref<2x2x32x32xf32, #tpu.memory_space<vmem>>, vector<1x1x32x32xf32>
    %169 = vector.shape_cast %168 : vector<1x1x32x32xf32> to vector<32x32xf32>
    %cst_132 = arith.constant dense<0.000000e+00> : vector<8x32xf32>
    %170 = tpu.matmul %167, %169, %cst_132 {dimension_numbers = #tpu.dot_dimension_numbers<[1], [0], [0], [1], [0, 0, 1, 1], [], []>} : vector<8x32xf32>, vector<32x32xf32>, vector<8x32xf32> -> vector<8x32xf32>
    %c1_133 = arith.constant 1 : index
    %c0_134 = arith.constant 0 : index
    %c0_135 = arith.constant 0 : index
    %c0_136 = arith.constant 0 : index
    %171 = vector.load %arg5[%c1_133, %c0_134, %c0_135, %c0_136] : memref<2x2x1x32xf32, #tpu.memory_space<vmem>>, vector<1x1x1x32xf32>
    %172 = vector.shape_cast %171 : vector<1x1x1x32xf32> to vector<1x32xf32>
    %173 = vector.broadcast %172 : vector<1x32xf32> to vector<8x32xf32>
    %174 = arith.addf %170, %173 : vector<8x32xf32>
    %175 = arith.addf %167, %174 : vector<8x32xf32>
    %c1_137 = arith.constant 1 : index
    %c0_138 = arith.constant 0 : index
    %c0_139 = arith.constant 0 : index
    %c0_140 = arith.constant 0 : index
    %176 = vector.load %arg6[%c1_137, %c0_138, %c0_139, %c0_140] : memref<2x2x1x32xf32, #tpu.memory_space<vmem>>, vector<1x1x1x32xf32>
    %177 = vector.shape_cast %176 : vector<1x1x1x32xf32> to vector<1x32xf32>
    %c1_141 = arith.constant 1 : index
    %c0_142 = arith.constant 0 : index
    %c0_143 = arith.constant 0 : index
    %c0_144 = arith.constant 0 : index
    %178 = vector.load %arg7[%c1_141, %c0_142, %c0_143, %c0_144] : memref<2x2x1x32xf32, #tpu.memory_space<vmem>>, vector<1x1x1x32xf32>
    %179 = vector.shape_cast %178 : vector<1x1x1x32xf32> to vector<1x32xf32>
    %cst_145 = arith.constant dense<0.000000e+00> : vector<8xf32>
    %180 = vector.multi_reduction <add>, %175, %cst_145 [1] : vector<8x32xf32> to vector<8xf32>
    %181 = vector.shape_cast %180 : vector<8xf32> to vector<8x1xf32>
    %cst_146 = arith.constant 3.200000e+01 : f32
    %182 = vector.broadcast %cst_146 : f32 to vector<8x1xf32>
    %183 = arith.divf %181, %182 : vector<8x1xf32>
    %184 = vector.broadcast %183 : vector<8x1xf32> to vector<8x32xf32>
    %185 = arith.subf %175, %184 : vector<8x32xf32>
    %186 = arith.mulf %185, %185 : vector<8x32xf32>
    %cst_147 = arith.constant dense<0.000000e+00> : vector<8xf32>
    %187 = vector.multi_reduction <add>, %186, %cst_147 [1] : vector<8x32xf32> to vector<8xf32>
    %188 = vector.shape_cast %187 : vector<8xf32> to vector<8x1xf32>
    %cst_148 = arith.constant 3.200000e+01 : f32
    %189 = vector.broadcast %cst_148 : f32 to vector<8x1xf32>
    %190 = arith.divf %188, %189 : vector<8x1xf32>
    %cst_149 = arith.constant 9.99999974E-6 : f32
    %191 = vector.broadcast %cst_149 : f32 to vector<8x1xf32>
    %192 = arith.addf %190, %191 : vector<8x1xf32>
    %193 = math.rsqrt %192 : vector<8x1xf32>
    %194 = vector.broadcast %193 : vector<8x1xf32> to vector<8x32xf32>
    %195 = arith.mulf %185, %194 : vector<8x32xf32>
    %196 = vector.broadcast %177 : vector<1x32xf32> to vector<8x32xf32>
    %197 = arith.mulf %195, %196 : vector<8x32xf32>
    %198 = vector.broadcast %179 : vector<1x32xf32> to vector<8x32xf32>
    %199 = arith.addf %197, %198 : vector<8x32xf32>
    %c1_150 = arith.constant 1 : index
    %c0_151 = arith.constant 0 : index
    %c0_152 = arith.constant 0 : index
    %c0_153 = arith.constant 0 : index
    %200 = vector.load %arg8[%c1_150, %c0_151, %c0_152, %c0_153] : memref<2x2x32x128xf32, #tpu.memory_space<vmem>>, vector<1x1x32x128xf32>
    %201 = vector.shape_cast %200 : vector<1x1x32x128xf32> to vector<32x128xf32>
    %cst_154 = arith.constant dense<0.000000e+00> : vector<8x128xf32>
    %202 = tpu.matmul %199, %201, %cst_154 {dimension_numbers = #tpu.dot_dimension_numbers<[1], [0], [0], [1], [0, 0, 1, 1], [], []>} : vector<8x32xf32>, vector<32x128xf32>, vector<8x128xf32> -> vector<8x128xf32>
    %c1_155 = arith.constant 1 : index
    %c0_156 = arith.constant 0 : index
    %c0_157 = arith.constant 0 : index
    %c0_158 = arith.constant 0 : index
    %203 = vector.load %arg9[%c1_155, %c0_156, %c0_157, %c0_158] : memref<2x2x1x128xf32, #tpu.memory_space<vmem>>, vector<1x1x1x128xf32>
    %204 = vector.shape_cast %203 : vector<1x1x1x128xf32> to vector<1x128xf32>
    %205 = vector.broadcast %204 : vector<1x128xf32> to vector<8x128xf32>
    %206 = arith.addf %202, %205 : vector<8x128xf32>
    %cst_159 = arith.constant 0.000000e+00 : f32
    %207 = vector.broadcast %cst_159 : f32 to vector<8x128xf32>
    %208 = arith.maximumf %206, %207 : vector<8x128xf32>
    %c1_160 = arith.constant 1 : index
    %c0_161 = arith.constant 0 : index
    %c0_162 = arith.constant 0 : index
    %c0_163 = arith.constant 0 : index
    %209 = vector.load %arg10[%c1_160, %c0_161, %c0_162, %c0_163] : memref<2x2x128x32xf32, #tpu.memory_space<vmem>>, vector<1x1x128x32xf32>
    %210 = vector.shape_cast %209 : vector<1x1x128x32xf32> to vector<128x32xf32>
    %cst_164 = arith.constant dense<0.000000e+00> : vector<8x32xf32>
    %211 = tpu.matmul %208, %210, %cst_164 {dimension_numbers = #tpu.dot_dimension_numbers<[1], [0], [0], [1], [0, 0, 1, 1], [], []>} : vector<8x128xf32>, vector<128x32xf32>, vector<8x32xf32> -> vector<8x32xf32>
    %c1_165 = arith.constant 1 : index
    %c0_166 = arith.constant 0 : index
    %c0_167 = arith.constant 0 : index
    %c0_168 = arith.constant 0 : index
    %212 = vector.load %arg11[%c1_165, %c0_166, %c0_167, %c0_168] : memref<2x2x1x32xf32, #tpu.memory_space<vmem>>, vector<1x1x1x32xf32>
    %213 = vector.shape_cast %212 : vector<1x1x1x32xf32> to vector<1x32xf32>
    %214 = vector.broadcast %213 : vector<1x32xf32> to vector<8x32xf32>
    %215 = arith.addf %211, %214 : vector<8x32xf32>
    %216 = arith.addf %199, %215 : vector<8x32xf32>
    %c1_169 = arith.constant 1 : index
    %c0_170 = arith.constant 0 : index
    %c0_171 = arith.constant 0 : index
    %c0_172 = arith.constant 0 : index
    %217 = vector.load %arg12[%c1_169, %c0_170, %c0_171, %c0_172] : memref<2x2x1x32xf32, #tpu.memory_space<vmem>>, vector<1x1x1x32xf32>
    %218 = vector.shape_cast %217 : vector<1x1x1x32xf32> to vector<1x32xf32>
    %c1_173 = arith.constant 1 : index
    %c0_174 = arith.constant 0 : index
    %c0_175 = arith.constant 0 : index
    %c0_176 = arith.constant 0 : index
    %219 = vector.load %arg13[%c1_173, %c0_174, %c0_175, %c0_176] : memref<2x2x1x32xf32, #tpu.memory_space<vmem>>, vector<1x1x1x32xf32>
    %220 = vector.shape_cast %219 : vector<1x1x1x32xf32> to vector<1x32xf32>
    %cst_177 = arith.constant dense<0.000000e+00> : vector<8xf32>
    %221 = vector.multi_reduction <add>, %216, %cst_177 [1] : vector<8x32xf32> to vector<8xf32>
    %222 = vector.shape_cast %221 : vector<8xf32> to vector<8x1xf32>
    %cst_178 = arith.constant 3.200000e+01 : f32
    %223 = vector.broadcast %cst_178 : f32 to vector<8x1xf32>
    %224 = arith.divf %222, %223 : vector<8x1xf32>
    %225 = vector.broadcast %224 : vector<8x1xf32> to vector<8x32xf32>
    %226 = arith.subf %216, %225 : vector<8x32xf32>
    %227 = arith.mulf %226, %226 : vector<8x32xf32>
    %cst_179 = arith.constant dense<0.000000e+00> : vector<8xf32>
    %228 = vector.multi_reduction <add>, %227, %cst_179 [1] : vector<8x32xf32> to vector<8xf32>
    %229 = vector.shape_cast %228 : vector<8xf32> to vector<8x1xf32>
    %cst_180 = arith.constant 3.200000e+01 : f32
    %230 = vector.broadcast %cst_180 : f32 to vector<8x1xf32>
    %231 = arith.divf %229, %230 : vector<8x1xf32>
    %cst_181 = arith.constant 9.99999974E-6 : f32
    %232 = vector.broadcast %cst_181 : f32 to vector<8x1xf32>
    %233 = arith.addf %231, %232 : vector<8x1xf32>
    %234 = math.rsqrt %233 : vector<8x1xf32>
    %235 = vector.broadcast %234 : vector<8x1xf32> to vector<8x32xf32>
    %236 = arith.mulf %226, %235 : vector<8x32xf32>
    %237 = vector.broadcast %218 : vector<1x32xf32> to vector<8x32xf32>
    %238 = arith.mulf %236, %237 : vector<8x32xf32>
    %239 = vector.broadcast %220 : vector<1x32xf32> to vector<8x32xf32>
    %240 = arith.addf %238, %239 : vector<8x32xf32>
    %c1_182 = arith.constant 1 : index
    %c1_183 = arith.constant 1 : index
    %c0_184 = arith.constant 0 : index
    %c0_185 = arith.constant 0 : index
    %241 = vector.load %arg4[%c1_182, %c1_183, %c0_184, %c0_185] : memref<2x2x32x32xf32, #tpu.memory_space<vmem>>, vector<1x1x32x32xf32>
    %242 = vector.shape_cast %241 : vector<1x1x32x32xf32> to vector<32x32xf32>
    %cst_186 = arith.constant dense<0.000000e+00> : vector<8x32xf32>
    %243 = tpu.matmul %240, %242, %cst_186 {dimension_numbers = #tpu.dot_dimension_numbers<[1], [0], [0], [1], [0, 0, 1, 1], [], []>} : vector<8x32xf32>, vector<32x32xf32>, vector<8x32xf32> -> vector<8x32xf32>
    %c1_187 = arith.constant 1 : index
    %c1_188 = arith.constant 1 : index
    %c0_189 = arith.constant 0 : index
    %c0_190 = arith.constant 0 : index
    %244 = vector.load %arg5[%c1_187, %c1_188, %c0_189, %c0_190] : memref<2x2x1x32xf32, #tpu.memory_space<vmem>>, vector<1x1x1x32xf32>
    %245 = vector.shape_cast %244 : vector<1x1x1x32xf32> to vector<1x32xf32>
    %246 = vector.broadcast %245 : vector<1x32xf32> to vector<8x32xf32>
    %247 = arith.addf %243, %246 : vector<8x32xf32>
    %248 = arith.addf %240, %247 : vector<8x32xf32>
    %c1_191 = arith.constant 1 : index
    %c1_192 = arith.constant 1 : index
    %c0_193 = arith.constant 0 : index
    %c0_194 = arith.constant 0 : index
    %249 = vector.load %arg6[%c1_191, %c1_192, %c0_193, %c0_194] : memref<2x2x1x32xf32, #tpu.memory_space<vmem>>, vector<1x1x1x32xf32>
    %250 = vector.shape_cast %249 : vector<1x1x1x32xf32> to vector<1x32xf32>
    %c1_195 = arith.constant 1 : index
    %c1_196 = arith.constant 1 : index
    %c0_197 = arith.constant 0 : index
    %c0_198 = arith.constant 0 : index
    %251 = vector.load %arg7[%c1_195, %c1_196, %c0_197, %c0_198] : memref<2x2x1x32xf32, #tpu.memory_space<vmem>>, vector<1x1x1x32xf32>
    %252 = vector.shape_cast %251 : vector<1x1x1x32xf32> to vector<1x32xf32>
    %cst_199 = arith.constant dense<0.000000e+00> : vector<8xf32>
    %253 = vector.multi_reduction <add>, %248, %cst_199 [1] : vector<8x32xf32> to vector<8xf32>
    %254 = vector.shape_cast %253 : vector<8xf32> to vector<8x1xf32>
    %cst_200 = arith.constant 3.200000e+01 : f32
    %255 = vector.broadcast %cst_200 : f32 to vector<8x1xf32>
    %256 = arith.divf %254, %255 : vector<8x1xf32>
    %257 = vector.broadcast %256 : vector<8x1xf32> to vector<8x32xf32>
    %258 = arith.subf %248, %257 : vector<8x32xf32>
    %259 = arith.mulf %258, %258 : vector<8x32xf32>
    %cst_201 = arith.constant dense<0.000000e+00> : vector<8xf32>
    %260 = vector.multi_reduction <add>, %259, %cst_201 [1] : vector<8x32xf32> to vector<8xf32>
    %261 = vector.shape_cast %260 : vector<8xf32> to vector<8x1xf32>
    %cst_202 = arith.constant 3.200000e+01 : f32
    %262 = vector.broadcast %cst_202 : f32 to vector<8x1xf32>
    %263 = arith.divf %261, %262 : vector<8x1xf32>
    %cst_203 = arith.constant 9.99999974E-6 : f32
    %264 = vector.broadcast %cst_203 : f32 to vector<8x1xf32>
    %265 = arith.addf %263, %264 : vector<8x1xf32>
    %266 = math.rsqrt %265 : vector<8x1xf32>
    %267 = vector.broadcast %266 : vector<8x1xf32> to vector<8x32xf32>
    %268 = arith.mulf %258, %267 : vector<8x32xf32>
    %269 = vector.broadcast %250 : vector<1x32xf32> to vector<8x32xf32>
    %270 = arith.mulf %268, %269 : vector<8x32xf32>
    %271 = vector.broadcast %252 : vector<1x32xf32> to vector<8x32xf32>
    %272 = arith.addf %270, %271 : vector<8x32xf32>
    %c1_204 = arith.constant 1 : index
    %c1_205 = arith.constant 1 : index
    %c0_206 = arith.constant 0 : index
    %c0_207 = arith.constant 0 : index
    %273 = vector.load %arg8[%c1_204, %c1_205, %c0_206, %c0_207] : memref<2x2x32x128xf32, #tpu.memory_space<vmem>>, vector<1x1x32x128xf32>
    %274 = vector.shape_cast %273 : vector<1x1x32x128xf32> to vector<32x128xf32>
    %cst_208 = arith.constant dense<0.000000e+00> : vector<8x128xf32>
    %275 = tpu.matmul %272, %274, %cst_208 {dimension_numbers = #tpu.dot_dimension_numbers<[1], [0], [0], [1], [0, 0, 1, 1], [], []>} : vector<8x32xf32>, vector<32x128xf32>, vector<8x128xf32> -> vector<8x128xf32>
    %c1_209 = arith.constant 1 : index
    %c1_210 = arith.constant 1 : index
    %c0_211 = arith.constant 0 : index
    %c0_212 = arith.constant 0 : index
    %276 = vector.load %arg9[%c1_209, %c1_210, %c0_211, %c0_212] : memref<2x2x1x128xf32, #tpu.memory_space<vmem>>, vector<1x1x1x128xf32>
    %277 = vector.shape_cast %276 : vector<1x1x1x128xf32> to vector<1x128xf32>
    %278 = vector.broadcast %277 : vector<1x128xf32> to vector<8x128xf32>
    %279 = arith.addf %275, %278 : vector<8x128xf32>
    %cst_213 = arith.constant 0.000000e+00 : f32
    %280 = vector.broadcast %cst_213 : f32 to vector<8x128xf32>
    %281 = arith.maximumf %279, %280 : vector<8x128xf32>
    %c1_214 = arith.constant 1 : index
    %c1_215 = arith.constant 1 : index
    %c0_216 = arith.constant 0 : index
    %c0_217 = arith.constant 0 : index
    %282 = vector.load %arg10[%c1_214, %c1_215, %c0_216, %c0_217] : memref<2x2x128x32xf32, #tpu.memory_space<vmem>>, vector<1x1x128x32xf32>
    %283 = vector.shape_cast %282 : vector<1x1x128x32xf32> to vector<128x32xf32>
    %cst_218 = arith.constant dense<0.000000e+00> : vector<8x32xf32>
    %284 = tpu.matmul %281, %283, %cst_218 {dimension_numbers = #tpu.dot_dimension_numbers<[1], [0], [0], [1], [0, 0, 1, 1], [], []>} : vector<8x128xf32>, vector<128x32xf32>, vector<8x32xf32> -> vector<8x32xf32>
    %c1_219 = arith.constant 1 : index
    %c1_220 = arith.constant 1 : index
    %c0_221 = arith.constant 0 : index
    %c0_222 = arith.constant 0 : index
    %285 = vector.load %arg11[%c1_219, %c1_220, %c0_221, %c0_222] : memref<2x2x1x32xf32, #tpu.memory_space<vmem>>, vector<1x1x1x32xf32>
    %286 = vector.shape_cast %285 : vector<1x1x1x32xf32> to vector<1x32xf32>
    %287 = vector.broadcast %286 : vector<1x32xf32> to vector<8x32xf32>
    %288 = arith.addf %284, %287 : vector<8x32xf32>
    %289 = arith.addf %272, %288 : vector<8x32xf32>
    %c1_223 = arith.constant 1 : index
    %c1_224 = arith.constant 1 : index
    %c0_225 = arith.constant 0 : index
    %c0_226 = arith.constant 0 : index
    %290 = vector.load %arg12[%c1_223, %c1_224, %c0_225, %c0_226] : memref<2x2x1x32xf32, #tpu.memory_space<vmem>>, vector<1x1x1x32xf32>
    %291 = vector.shape_cast %290 : vector<1x1x1x32xf32> to vector<1x32xf32>
    %c1_227 = arith.constant 1 : index
    %c1_228 = arith.constant 1 : index
    %c0_229 = arith.constant 0 : index
    %c0_230 = arith.constant 0 : index
    %292 = vector.load %arg13[%c1_227, %c1_228, %c0_229, %c0_230] : memref<2x2x1x32xf32, #tpu.memory_space<vmem>>, vector<1x1x1x32xf32>
    %293 = vector.shape_cast %292 : vector<1x1x1x32xf32> to vector<1x32xf32>
    %cst_231 = arith.constant dense<0.000000e+00> : vector<8xf32>
    %294 = vector.multi_reduction <add>, %289, %cst_231 [1] : vector<8x32xf32> to vector<8xf32>
    %295 = vector.shape_cast %294 : vector<8xf32> to vector<8x1xf32>
    %cst_232 = arith.constant 3.200000e+01 : f32
    %296 = vector.broadcast %cst_232 : f32 to vector<8x1xf32>
    %297 = arith.divf %295, %296 : vector<8x1xf32>
    %298 = vector.broadcast %297 : vector<8x1xf32> to vector<8x32xf32>
    %299 = arith.subf %289, %298 : vector<8x32xf32>
    %300 = arith.mulf %299, %299 : vector<8x32xf32>
    %cst_233 = arith.constant dense<0.000000e+00> : vector<8xf32>
    %301 = vector.multi_reduction <add>, %300, %cst_233 [1] : vector<8x32xf32> to vector<8xf32>
    %302 = vector.shape_cast %301 : vector<8xf32> to vector<8x1xf32>
    %cst_234 = arith.constant 3.200000e+01 : f32
    %303 = vector.broadcast %cst_234 : f32 to vector<8x1xf32>
    %304 = arith.divf %302, %303 : vector<8x1xf32>
    %cst_235 = arith.constant 9.99999974E-6 : f32
    %305 = vector.broadcast %cst_235 : f32 to vector<8x1xf32>
    %306 = arith.addf %304, %305 : vector<8x1xf32>
    %307 = math.rsqrt %306 : vector<8x1xf32>
    %308 = vector.broadcast %307 : vector<8x1xf32> to vector<8x32xf32>
    %309 = arith.mulf %299, %308 : vector<8x32xf32>
    %310 = vector.broadcast %291 : vector<1x32xf32> to vector<8x32xf32>
    %311 = arith.mulf %309, %310 : vector<8x32xf32>
    %312 = vector.broadcast %293 : vector<1x32xf32> to vector<8x32xf32>
    %313 = arith.addf %311, %312 : vector<8x32xf32>
    %c1_236 = arith.constant 1 : index
    %c0_237 = arith.constant 0 : index
    %c0_238 = arith.constant 0 : index
    %314 = vector.load %arg14[%c1_236, %c0_237, %c0_238] : memref<2x32x1xf32, #tpu.memory_space<vmem>>, vector<1x32x1xf32>
    %315 = vector.shape_cast %314 : vector<1x32x1xf32> to vector<32x1xf32>
    %cst_239 = arith.constant dense<0.000000e+00> : vector<8x1xf32>
    %316 = tpu.matmul %313, %315, %cst_239 {dimension_numbers = #tpu.dot_dimension_numbers<[1], [0], [0], [1], [0, 0, 1, 1], [], []>} : vector<8x32xf32>, vector<32x1xf32>, vector<8x1xf32> -> vector<8x1xf32>
    %c1_240 = arith.constant 1 : index
    %c0_241 = arith.constant 0 : index
    %c0_242 = arith.constant 0 : index
    %317 = vector.load %arg15[%c1_240, %c0_241, %c0_242] : memref<2x1x1xf32, #tpu.memory_space<vmem>>, vector<1x1x1xf32>
    %318 = vector.shape_cast %317 : vector<1x1x1xf32> to vector<1x1xf32>
    %319 = vector.broadcast %318 : vector<1x1xf32> to vector<8x1xf32>
    %320 = arith.addf %316, %319 : vector<8x1xf32>
    %321 = tpu.concatenate %160, %320 in 1 : vector<8x1xf32>, vector<8x1xf32> -> vector<8x2xf32>
    %c0_243 = arith.constant 0 : index
    %c0_244 = arith.constant 0 : index
    %322 = vector.load %arg16[%c0_243, %c0_244] : memref<8x2xf32, #tpu.memory_space<vmem>>, vector<8x2xf32>
    tpu.vector_store %arg16[%c0_243, %c0_244], %321 {strides = array<i32>} : memref<8x2xf32, #tpu.memory_space<vmem>>, vector<8x2xf32>,
    return
  }
  func.func @transform_0(%arg0: i32) -> (i32, i32) {
    %c0_i32 = arith.constant 0 : i32
    %c0_i32_0 = arith.constant 0 : i32
    return %arg0, %c0_i32 : i32, i32
  }
  func.func @transform_1(%arg0: i32) -> (i32, i32, i32) {
    %c0_i32 = arith.constant 0 : i32
    %c0_i32_0 = arith.constant 0 : i32
    %c0_i32_1 = arith.constant 0 : i32
    %c0_i32_2 = arith.constant 0 : i32
    return %c0_i32, %c0_i32_0, %c0_i32_1 : i32, i32, i32
  }
  func.func @transform_2(%arg0: i32) -> (i32, i32, i32) {
    %c0_i32 = arith.constant 0 : i32
    %c0_i32_0 = arith.constant 0 : i32
    %c0_i32_1 = arith.constant 0 : i32
    %c0_i32_2 = arith.constant 0 : i32
    return %c0_i32, %c0_i32_0, %c0_i32_1 : i32, i32, i32
  }
  func.func @transform_3(%arg0: i32) -> (i32, i32, i32, i32) {
    %c0_i32 = arith.constant 0 : i32
    %c0_i32_0 = arith.constant 0 : i32
    %c0_i32_1 = arith.constant 0 : i32
    %c0_i32_2 = arith.constant 0 : i32
    %c0_i32_3 = arith.constant 0 : i32
    return %c0_i32, %c0_i32_0, %c0_i32_1, %c0_i32_2 : i32, i32, i32, i32
  }
  func.func @transform_4(%arg0: i32) -> (i32, i32, i32, i32) {
    %c0_i32 = arith.constant 0 : i32
    %c0_i32_0 = arith.constant 0 : i32
    %c0_i32_1 = arith.constant 0 : i32
    %c0_i32_2 = arith.constant 0 : i32
    %c0_i32_3 = arith.constant 0 : i32
    return %c0_i32, %c0_i32_0, %c0_i32_1, %c0_i32_2 : i32, i32, i32, i32
  }
  func.func @transform_5(%arg0: i32) -> (i32, i32, i32, i32) {
    %c0_i32 = arith.constant 0 : i32
    %c0_i32_0 = arith.constant 0 : i32
    %c0_i32_1 = arith.constant 0 : i32
    %c0_i32_2 = arith.constant 0 : i32
    %c0_i32_3 = arith.constant 0 : i32
    return %c0_i32, %c0_i32_0, %c0_i32_1, %c0_i32_2 : i32, i32, i32, i32
  }
  func.func @transform_6(%arg0: i32) -> (i32, i32, i32, i32) {
    %c0_i32 = arith.constant 0 : i32
    %c0_i32_0 = arith.constant 0 : i32
    %c0_i32_1 = arith.constant 0 : i32
    %c0_i32_2 = arith.constant 0 : i32
    %c0_i32_3 = arith.constant 0 : i32
    return %c0_i32, %c0_i32_0, %c0_i32_1, %c0_i32_2 : i32, i32, i32, i32
  }
  func.func @transform_7(%arg0: i32) -> (i32, i32, i32, i32) {
    %c0_i32 = arith.constant 0 : i32
    %c0_i32_0 = arith.constant 0 : i32
    %c0_i32_1 = arith.constant 0 : i32
    %c0_i32_2 = arith.constant 0 : i32
    %c0_i32_3 = arith.constant 0 : i32
    return %c0_i32, %c0_i32_0, %c0_i32_1, %c0_i32_2 : i32, i32, i32, i32
  }
  func.func @transform_8(%arg0: i32) -> (i32, i32, i32, i32) {
    %c0_i32 = arith.constant 0 : i32
    %c0_i32_0 = arith.constant 0 : i32
    %c0_i32_1 = arith.constant 0 : i32
    %c0_i32_2 = arith.constant 0 : i32
    %c0_i32_3 = arith.constant 0 : i32
    return %c0_i32, %c0_i32_0, %c0_i32_1, %c0_i32_2 : i32, i32, i32, i32
  }
  func.func @transform_9(%arg0: i32) -> (i32, i32, i32, i32) {
    %c0_i32 = arith.constant 0 : i32
    %c0_i32_0 = arith.constant 0 : i32
    %c0_i32_1 = arith.constant 0 : i32
    %c0_i32_2 = arith.constant 0 : i32
    %c0_i32_3 = arith.constant 0 : i32
    return %c0_i32, %c0_i32_0, %c0_i32_1, %c0_i32_2 : i32, i32, i32, i32
  }
  func.func @transform_10(%arg0: i32) -> (i32, i32, i32, i32) {
    %c0_i32 = arith.constant 0 : i32
    %c0_i32_0 = arith.constant 0 : i32
    %c0_i32_1 = arith.constant 0 : i32
    %c0_i32_2 = arith.constant 0 : i32
    %c0_i32_3 = arith.constant 0 : i32
    return %c0_i32, %c0_i32_0, %c0_i32_1, %c0_i32_2 : i32, i32, i32, i32
  }
  func.func @transform_11(%arg0: i32) -> (i32, i32, i32, i32) {
    %c0_i32 = arith.constant 0 : i32
    %c0_i32_0 = arith.constant 0 : i32
    %c0_i32_1 = arith.constant 0 : i32
    %c0_i32_2 = arith.constant 0 : i32
    %c0_i32_3 = arith.constant 0 : i32
    return %c0_i32, %c0_i32_0, %c0_i32_1, %c0_i32_2 : i32, i32, i32, i32
  }
  func.func @transform_12(%arg0: i32) -> (i32, i32, i32, i32) {
    %c0_i32 = arith.constant 0 : i32
    %c0_i32_0 = arith.constant 0 : i32
    %c0_i32_1 = arith.constant 0 : i32
    %c0_i32_2 = arith.constant 0 : i32
    %c0_i32_3 = arith.constant 0 : i32
    return %c0_i32, %c0_i32_0, %c0_i32_1, %c0_i32_2 : i32, i32, i32, i32
  }
  func.func @transform_13(%arg0: i32) -> (i32, i32, i32) {
    %c0_i32 = arith.constant 0 : i32
    %c0_i32_0 = arith.constant 0 : i32
    %c0_i32_1 = arith.constant 0 : i32
    %c0_i32_2 = arith.constant 0 : i32
    return %c0_i32, %c0_i32_0, %c0_i32_1 : i32, i32, i32
  }
  func.func @transform_14(%arg0: i32) -> (i32, i32, i32) {
    %c0_i32 = arith.constant 0 : i32
    %c0_i32_0 = arith.constant 0 : i32
    %c0_i32_1 = arith.constant 0 : i32
    %c0_i32_2 = arith.constant 0 : i32
    return %c0_i32, %c0_i32_0, %c0_i32_1 : i32, i32, i32
  }
  func.func @transform_15(%arg0: i32) -> (i32, i32) {
    %c0_i32 = arith.constant 0 : i32
    %c0_i32_0 = arith.constant 0 : i32
    return %arg0, %c0_i32 : i32, i32
  }
}

</mosaic_0001>

<llo_original>
// kernel: tpu_custom_call.1
$region0: #{tpu_custom_call.1}
  #allocation0 [shape = 'u32[]', space=smem, size = 0x4, offset = 0x4, fixed_abs, tag = 'smem constant byte address 0x4 - core index']
  #allocation1 [shape = 'u32[144,128]{1,0:T(1,128)}', space=vmem, size = 0x12000, scoped, tag = 'internal scratch']
  %s0 = inlined_call_operand.vmem [shape: f32[8,38], index: 0, kind: input, shape index: {}]
  %s1 = inlined_call_operand.vmem [shape: f32[2,38,32], index: 1, kind: input, shape index: {}]
  %s2 = inlined_call_operand.vmem [shape: f32[2,1,32], index: 2, kind: input, shape index: {}]
  %s3 = inlined_call_operand.vmem [shape: f32[2,2,32,32], index: 3, kind: input, shape index: {}]
  %s4 = inlined_call_operand.vmem [shape: f32[2,2,1,32], index: 4, kind: input, shape index: {}]
  %s5 = inlined_call_operand.vmem [shape: f32[2,2,1,32], index: 5, kind: input, shape index: {}]
  %s6 = inlined_call_operand.vmem [shape: f32[2,2,1,32], index: 6, kind: input, shape index: {}]
  %s7 = inlined_call_operand.vmem [shape: f32[2,2,32,128], index: 7, kind: input, shape index: {}]
  %s8 = inlined_call_operand.vmem [shape: f32[2,2,1,128], index: 8, kind: input, shape index: {}]
  %s9 = inlined_call_operand.vmem [shape: f32[2,2,128,32], index: 9, kind: input, shape index: {}]
  %s10 = inlined_call_operand.vmem [shape: f32[2,2,1,32], index: 10, kind: input, shape index: {}]
  %s11 = inlined_call_operand.vmem [shape: f32[2,2,1,32], index: 11, kind: input, shape index: {}]
  %s12 = inlined_call_operand.vmem [shape: f32[2,2,1,32], index: 12, kind: input, shape index: {}]
  %s13 = inlined_call_operand.vmem [shape: f32[2,32,1], index: 13, kind: input, shape index: {}]
  %s14 = inlined_call_operand.vmem [shape: f32[2,1,1], index: 14, kind: input, shape index: {}]
  %s15 = inlined_call_operand.vmem [shape: f32[8,2], index: 15, kind: output, shape index: {}]
  %s16 = sld [smem:[#allocation0]]
  $region70: #{tpu_custom_call.1} parent=0
    _
  %s18 = ssub.s32 1, %s16
  %s19 = scalar_select 0, %s18, %s16
  // Predicated region
  $region2: #{tpu_custom_call.1} parent=0 // pred_check
    _
  $region3: #{tpu_custom_call.1} parent=0 // pred_check_branch
    %21 = sbr.rel (0) target = $region5
  $region4: #{tpu_custom_call.1} parent=0 // pred_region
    _
  $region5: #{tpu_custom_call.1} parent=0 // pred_fallthru
    _
  // Predicated region
  $region6: #{tpu_custom_call.1} parent=0 // pred_check
    _
  $region7: #{tpu_custom_call.1} parent=0 // pred_check_branch
    %23 = sbr.rel (0) target = $region9
  $region8: #{tpu_custom_call.1} parent=0 // pred_region
    _
  $region9: #{tpu_custom_call.1} parent=0 // pred_fallthru
    _
  // Predicated region
  $region10: #{tpu_custom_call.1} parent=0 // pred_check
    _
  $region11: #{tpu_custom_call.1} parent=0 // pred_check_branch
    %25 = sbr.rel (0) target = $region13
  $region12: #{tpu_custom_call.1} parent=0 // pred_region
    _
  $region13: #{tpu_custom_call.1} parent=0 // pred_fallthru
    _
  // Predicated region
  $region14: #{tpu_custom_call.1} parent=0 // pred_check
    _
  $region15: #{tpu_custom_call.1} parent=0 // pred_check_branch
    %27 = sbr.rel (0) target = $region17
  $region16: #{tpu_custom_call.1} parent=0 // pred_region
    _
  $region17: #{tpu_custom_call.1} parent=0 // pred_fallthru
    _
  // Predicated region
  $region18: #{tpu_custom_call.1} parent=0 // pred_check
    _
  $region19: #{tpu_custom_call.1} parent=0 // pred_check_branch
    %29 = sbr.rel (0) target = $region21
  $region20: #{tpu_custom_call.1} parent=0 // pred_region
    _
  $region21: #{tpu_custom_call.1} parent=0 // pred_fallthru
    _
  // Predicated region
  $region22: #{tpu_custom_call.1} parent=0 // pred_check
    _
  $region23: #{tpu_custom_call.1} parent=0 // pred_check_branch
    %31 = sbr.rel (0) target = $region25
  $region24: #{tpu_custom_call.1} parent=0 // pred_region
    _
  $region25: #{tpu_custom_call.1} parent=0 // pred_fallthru
    _
  // Predicated region
  $region26: #{tpu_custom_call.1} parent=0 // pred_check
    _
  $region27: #{tpu_custom_call.1} parent=0 // pred_check_branch
    %33 = sbr.rel (0) target = $region29
  $region28: #{tpu_custom_call.1} parent=0 // pred_region
    _
  $region29: #{tpu_custom_call.1} parent=0 // pred_fallthru
    _
  // Predicated region
  $region30: #{tpu_custom_call.1} parent=0 // pred_check
    _
  $region31: #{tpu_custom_call.1} parent=0 // pred_check_branch
    %35 = sbr.rel (0) target = $region33
  $region32: #{tpu_custom_call.1} parent=0 // pred_region
    _
  $region33: #{tpu_custom_call.1} parent=0 // pred_fallthru
    _
  // Predicated region
  $region34: #{tpu_custom_call.1} parent=0 // pred_check
    _
  $region35: #{tpu_custom_call.1} parent=0 // pred_check_branch
    %37 = sbr.rel (0) target = $region37
  $region36: #{tpu_custom_call.1} parent=0 // pred_region
    _
  $region37: #{tpu_custom_call.1} parent=0 // pred_fallthru
    _
  // Predicated region
  $region38: #{tpu_custom_call.1} parent=0 // pred_check
    _
  $region39: #{tpu_custom_call.1} parent=0 // pred_check_branch
    %39 = sbr.rel (0) target = $region41
  $region40: #{tpu_custom_call.1} parent=0 // pred_region
    _
  $region41: #{tpu_custom_call.1} parent=0 // pred_fallthru
    _
  // Predicated region
  $region42: #{tpu_custom_call.1} parent=0 // pred_check
    _
  $region43: #{tpu_custom_call.1} parent=0 // pred_check_branch
    %41 = sbr.rel (0) target = $region45
  $region44: #{tpu_custom_call.1} parent=0 // pred_region
    _
  $region45: #{tpu_custom_call.1} parent=0 // pred_fallthru
    _
  // Predicated region
  $region46: #{tpu_custom_call.1} parent=0 // pred_check
    _
  $region47: #{tpu_custom_call.1} parent=0 // pred_check_branch
    %43 = sbr.rel (0) target = $region49
  $region48: #{tpu_custom_call.1} parent=0 // pred_region
    _
  $region49: #{tpu_custom_call.1} parent=0 // pred_fallthru
    _
  // Predicated region
  $region50: #{tpu_custom_call.1} parent=0 // pred_check
    _
  $region51: #{tpu_custom_call.1} parent=0 // pred_check_branch
    %45 = sbr.rel (0) target = $region53
  $region52: #{tpu_custom_call.1} parent=0 // pred_region
    _
  $region53: #{tpu_custom_call.1} parent=0 // pred_fallthru
    _
  // Predicated region
  $region54: #{tpu_custom_call.1} parent=0 // pred_check
    _
  $region55: #{tpu_custom_call.1} parent=0 // pred_check_branch
    %47 = sbr.rel (0) target = $region57
  $region56: #{tpu_custom_call.1} parent=0 // pred_region
    _
  $region57: #{tpu_custom_call.1} parent=0 // pred_fallthru
    _
  // Predicated region
  $region58: #{tpu_custom_call.1} parent=0 // pred_check
    _
  $region59: #{tpu_custom_call.1} parent=0 // pred_check_branch
    %49 = sbr.rel (0) target = $region61
  $region60: #{tpu_custom_call.1} parent=0 // pred_region
    _
  $region61: #{tpu_custom_call.1} parent=0 // pred_fallthru
    _
  %v50 = vld [vmem:[%s0] sm:$0xff]
  %v51 = vld [vmem:[%s1] sm:$0xff]
  %v52 = vld [vmem:[%s1 + $0x8] sm:$0xff]
  %v53 = vld [vmem:[%s1 + $0x10] sm:$0xff]
  %v54 = vld [vmem:[%s1 + $0x18] sm:$0xff]
  %v55 = vld [vmem:[%s1 + $0x20] sm:$0x3f]
  %v56 = vld [vmem:[%s2] sm:$0x1]
  %v58 = vlaneseq
  %v59 = vshrl.u32 %v58, 7
  %v60 = vsub.s32 0, %v59
  %v61 = vrot.slane %v56, %v60
  %vm63 = vcmask 310272
  %v65 = vsel %vm63, %v50, 0
  %vm67 = vcmask 1045504
  %v69 = vsel %vm67, %v55, 0
  %71 = vmatprep.subr.mxu0 0.0
  %72 = vmatpush1.msra.mxu0 %v51
  %73 = vmatprep.subr.mxu0 0.0
  %74 = vmatpush1.msra.mxu0 %v52
  %75 = vmatprep.subr.mxu0 0.0
  %76 = vmatpush1.msra.mxu0 %v53
  %77 = vmatprep.subr.mxu0 0.0
  %78 = vmatpush1.msra.mxu0 %v54
  %79 = vmatprep.subr.mxu0 0.0
  %80 = vmatpush1.msra.mxu0 %v69
  %81 = vmatprep.subr.mxu0 0.0
  %82 = vmatpush1.msra.mxu0 0.0
  %83 = vmatprep.subr.mxu0 0.0
  %84 = vmatpush1.msra.mxu0 0.0
  %85 = vmatprep.subr.mxu0 0.0
  %86 = vmatpush1.msra.mxu0 0.0
  %87 = vmatprep.subr.mxu0 0.0
  %88 = vmatpush1.msra.mxu0 0.0
  %89 = vmatprep.subr.mxu0 0.0
  %90 = vmatpush1.msra.mxu0 0.0
  %91 = vmatprep.subr.mxu0 0.0
  %92 = vmatpush1.msra.mxu0 0.0
  %93 = vmatprep.subr.mxu0 0.0
  %94 = vmatpush1.msra.mxu0 0.0
  %95 = vmatprep.subr.mxu0 0.0
  %96 = vmatpush1.msra.mxu0 0.0
  %97 = vmatprep.subr.mxu0 0.0
  %98 = vmatpush1.msra.mxu0 0.0
  %99 = vmatprep.subr.mxu0 0.0
  %100 = vmatpush1.msra.mxu0 0.0
  %101 = vmatprep.subr.mxu0 0.0
  %102 = vmatpush1.msra.mxu0 0.0
  %103 = vmatprep.subr.mxu0 0.0
  %104 = vmatpush1.msra.mxu0 0.0
  %105 = vmatprep.subr.mxu0 0.0
  %106 = vmatpush1.msra.mxu0 0.0
  %107 = vmatprep.subr.mxu0 0.0
  %108 = vmatpush1.msra.mxu0 0.0
  %109 = vmatprep.subr.mxu0 0.0
  %110 = vmatpush1.msra.mxu0 0.0
  %111 = vmatprep.subr.mxu0 0.0
  %112 = vmatpush1.msra.mxu0 0.0
  %113 = vmatprep.subr.mxu0 0.0
  %114 = vmatpush1.msra.mxu0 0.0
  %115 = vmatprep.subr.mxu0 0.0
  %116 = vmatpush1.msra.mxu0 0.0
  %117 = vmatprep.subr.mxu0 0.0
  %118 = vmatpush1.msra.mxu0 0.0
  %119 = vmatprep.subr.mxu0 0.0
  %120 = vmatpush1.msra.mxu0 0.0
  %121 = vmatprep.subr.mxu0 0.0
  %122 = vmatpush1.msra.mxu0 0.0
  %123 = vmatprep.subr.mxu0 0.0
  %124 = vmatpush1.msra.mxu0 0.0
  %125 = vmatprep.subr.mxu0 0.0
  %126 = vmatpush1.msra.mxu0 0.0
  %127 = vmatprep.subr.mxu0 0.0
  %128 = vmatpush1.msra.mxu0 0.0
  %129 = vmatprep.subr.mxu0 0.0
  %130 = vmatpush1.msra.mxu0 0.0
  %131 = vmatprep.subr.mxu0 0.0
  %132 = vmatpush1.msra.mxu0 0.0
  %133 = vmatprep.subr.mxu0 0.0
  %134 = vmatpush1.msra.mxu0 0.0
  %135 = vmatprep.mubr.f32.mxu0 0.0
  %136 = vmatmul.mubr.f32.gmra.mrb[0].mxu0 %v65
  %v137 = vpop.f32.mrb[0].mxu0
  %v138 = vadd.f32 %v61, %v137
  %v139 = vpop.f32.mrb[0].mxu0
  %140 = vdwg.mxu0
  %v141 = vld [vmem:[%s3] sm:$0xff]
  %v142 = vld [vmem:[%s3 + $0x8] sm:$0xff]
  %v143 = vld [vmem:[%s3 + $0x10] sm:$0xff]
  %v144 = vld [vmem:[%s3 + $0x18] sm:$0xff]
  %v145 = vld [vmem:[%s4] sm:$0x1]
  %v147 = vlaneseq
  %v148 = vshrl.u32 %v147, 7
  %v149 = vsub.s32 0, %v148
  %v150 = vrot.slane %v145, %v149
  %vm152 = vcmask 261120
  %v154 = vsel %vm152, %v138, 0
  %156 = vmatprep.subr.mxu0 0.0
  %157 = vmatpush1.msra.mxu0 %v141
  %158 = vmatprep.subr.mxu0 0.0
  %159 = vmatpush1.msra.mxu0 %v142
  %160 = vmatprep.subr.mxu0 0.0
  %161 = vmatpush1.msra.mxu0 %v143
  %162 = vmatprep.subr.mxu0 0.0
  %163 = vmatpush1.msra.mxu0 %v144
  %164 = vmatprep.subr.mxu0 0.0
  %165 = vmatpush1.msra.mxu0 0.0
  %166 = vmatprep.subr.mxu0 0.0
  %167 = vmatpush1.msra.mxu0 0.0
  %168 = vmatprep.subr.mxu0 0.0
  %169 = vmatpush1.msra.mxu0 0.0
  %170 = vmatprep.subr.mxu0 0.0
  %171 = vmatpush1.msra.mxu0 0.0
  %172 = vmatprep.subr.mxu0 0.0
  %173 = vmatpush1.msra.mxu0 0.0
  %174 = vmatprep.subr.mxu0 0.0
  %175 = vmatpush1.msra.mxu0 0.0
  %176 = vmatprep.subr.mxu0 0.0
  %177 = vmatpush1.msra.mxu0 0.0
  %178 = vmatprep.subr.mxu0 0.0
  %179 = vmatpush1.msra.mxu0 0.0
  %180 = vmatprep.subr.mxu0 0.0
  %181 = vmatpush1.msra.mxu0 0.0
  %182 = vmatprep.subr.mxu0 0.0
  %183 = vmatpush1.msra.mxu0 0.0
  %184 = vmatprep.subr.mxu0 0.0
  %185 = vmatpush1.msra.mxu0 0.0
  %186 = vmatprep.subr.mxu0 0.0
  %187 = vmatpush1.msra.mxu0 0.0
  %188 = vmatprep.subr.mxu0 0.0
  %189 = vmatpush1.msra.mxu0 0.0
  %190 = vmatprep.subr.mxu0 0.0
  %191 = vmatpush1.msra.mxu0 0.0
  %192 = vmatprep.subr.mxu0 0.0
  %193 = vmatpush1.msra.mxu0 0.0
  %194 = vmatprep.subr.mxu0 0.0
  %195 = vmatpush1.msra.mxu0 0.0
  %196 = vmatprep.subr.mxu0 0.0
  %197 = vmatpush1.msra.mxu0 0.0
  %198 = vmatprep.subr.mxu0 0.0
  %199 = vmatpush1.msra.mxu0 0.0
  %200 = vmatprep.subr.mxu0 0.0
  %201 = vmatpush1.msra.mxu0 0.0
  %202 = vmatprep.subr.mxu0 0.0
  %203 = vmatpush1.msra.mxu0 0.0
  %204 = vmatprep.subr.mxu0 0.0
  %205 = vmatpush1.msra.mxu0 0.0
  %206 = vmatprep.subr.mxu0 0.0
  %207 = vmatpush1.msra.mxu0 0.0
  %208 = vmatprep.subr.mxu0 0.0
  %209 = vmatpush1.msra.mxu0 0.0
  %210 = vmatprep.subr.mxu0 0.0
  %211 = vmatpush1.msra.mxu0 0.0
  %212 = vmatprep.subr.mxu0 0.0
  %213 = vmatpush1.msra.mxu0 0.0
  %214 = vmatprep.subr.mxu0 0.0
  %215 = vmatpush1.msra.mxu0 0.0
  %216 = vmatprep.subr.mxu0 0.0
  %217 = vmatpush1.msra.mxu0 0.0
  %218 = vmatprep.subr.mxu0 0.0
  %219 = vmatpush1.msra.mxu0 0.0
  %220 = vmatprep.mubr.f32.mxu0 0.0
  %221 = vmatmul.mubr.f32.gmra.mrb[0].mxu0 %v154
  %v222 = vpop.f32.mrb[0].mxu0
  %v223 = vadd.f32 %v150, %v222
  %v224 = vpop.f32.mrb[0].mxu0
  %225 = vdwg.mxu0
  %v226 = vadd.f32 %v138, %v223
  %v227 = vld [vmem:[%s5] sm:$0x1]
  %v228 = vld [vmem:[%s6] sm:$0x1]
  %v229 = vsel %vm152, %v226, 0.0
  %230 = vadd.xlane.f32.xlu0 %v229
  %v231 = vpop.xlane.xlu0 %230
  %v232 = vrcp.pop 32.0
  %v233 = vmul.f32 %v231, %v232
  %v234 = vsub.f32 %v226, %v233
  %v235 = vmul.f32 %v234, %v234
  %v236 = vsel %vm152, %v235, 0.0
  %237 = vadd.xlane.f32.xlu0 %v236
  %v238 = vpop.xlane.xlu0 %237
  %v239 = vmul.f32 %v238, %v232
  %v240 = vadd.f32 %v239, 1e-05
  %v241 = vrsqrt.pop %v240
  %v242 = vmul.f32 %v234, %v241
  %v244 = vlaneseq
  %v245 = vshrl.u32 %v244, 7
  %v246 = vsub.s32 0, %v245
  %v247 = vrot.slane %v227, %v246
  %v249 = vmul.f32 %v242, %v247
  %v251 = vlaneseq
  %v252 = vshrl.u32 %v251, 7
  %v253 = vsub.s32 0, %v252
  %v254 = vrot.slane %v228, %v253
  %v256 = vadd.f32 %v249, %v254
  %v257 = vld [vmem:[%s7] sm:$0xff]
  %v258 = vld [vmem:[%s7 + $0x8] sm:$0xff]
  %v259 = vld [vmem:[%s7 + $0x10] sm:$0xff]
  %v260 = vld [vmem:[%s7 + $0x18] sm:$0xff]
  %v261 = vld [vmem:[%s8] sm:$0x1]
  %v263 = vlaneseq
  %v264 = vshrl.u32 %v263, 7
  %v265 = vsub.s32 0, %v264
  %v266 = vrot.slane %v261, %v265
  %v269 = vsel %vm152, %v256, 0
  %271 = vmatprep.subr.mxu0 0.0
  %272 = vmatpush1.msra.mxu0 %v257
  %273 = vmatprep.subr.mxu0 0.0
  %274 = vmatpush1.msra.mxu0 %v258
  %275 = vmatprep.subr.mxu0 0.0
  %276 = vmatpush1.msra.mxu0 %v259
  %277 = vmatprep.subr.mxu0 0.0
  %278 = vmatpush1.msra.mxu0 %v260
  %279 = vmatprep.subr.mxu0 0.0
  %280 = vmatpush1.msra.mxu0 0.0
  %281 = vmatprep.subr.mxu0 0.0
  %282 = vmatpush1.msra.mxu0 0.0
  %283 = vmatprep.subr.mxu0 0.0
  %284 = vmatpush1.msra.mxu0 0.0
  %285 = vmatprep.subr.mxu0 0.0
  %286 = vmatpush1.msra.mxu0 0.0
  %287 = vmatprep.subr.mxu0 0.0
  %288 = vmatpush1.msra.mxu0 0.0
  %289 = vmatprep.subr.mxu0 0.0
  %290 = vmatpush1.msra.mxu0 0.0
  %291 = vmatprep.subr.mxu0 0.0
  %292 = vmatpush1.msra.mxu0 0.0
  %293 = vmatprep.subr.mxu0 0.0
  %294 = vmatpush1.msra.mxu0 0.0
  %295 = vmatprep.subr.mxu0 0.0
  %296 = vmatpush1.msra.mxu0 0.0
  %297 = vmatprep.subr.mxu0 0.0
  %298 = vmatpush1.msra.mxu0 0.0
  %299 = vmatprep.subr.mxu0 0.0
  %300 = vmatpush1.msra.mxu0 0.0
  %301 = vmatprep.subr.mxu0 0.0
  %302 = vmatpush1.msra.mxu0 0.0
  %303 = vmatprep.subr.mxu0 0.0
  %304 = vmatpush1.msra.mxu0 0.0
  %305 = vmatprep.subr.mxu0 0.0
  %306 = vmatpush1.msra.mxu0 0.0
  %307 = vmatprep.subr.mxu0 0.0
  %308 = vmatpush1.msra.mxu0 0.0
  %309 = vmatprep.subr.mxu0 0.0
  %310 = vmatpush1.msra.mxu0 0.0
  %311 = vmatprep.subr.mxu0 0.0
  %312 = vmatpush1.msra.mxu0 0.0
  %313 = vmatprep.subr.mxu0 0.0
  %314 = vmatpush1.msra.mxu0 0.0
  %315 = vmatprep.subr.mxu0 0.0
  %316 = vmatpush1.msra.mxu0 0.0
  %317 = vmatprep.subr.mxu0 0.0
  %318 = vmatpush1.msra.mxu0 0.0
  %319 = vmatprep.subr.mxu0 0.0
  %320 = vmatpush1.msra.mxu0 0.0
  %321 = vmatprep.subr.mxu0 0.0
  %322 = vmatpush1.msra.mxu0 0.0
  %323 = vmatprep.subr.mxu0 0.0
  %324 = vmatpush1.msra.mxu0 0.0
  %325 = vmatprep.subr.mxu0 0.0
  %326 = vmatpush1.msra.mxu0 0.0
  %327 = vmatprep.subr.mxu0 0.0
  %328 = vmatpush1.msra.mxu0 0.0
  %329 = vmatprep.subr.mxu0 0.0
  %330 = vmatpush1.msra.mxu0 0.0
  %331 = vmatprep.subr.mxu0 0.0
  %332 = vmatpush1.msra.mxu0 0.0
  %333 = vmatprep.subr.mxu0 0.0
  %334 = vmatpush1.msra.mxu0 0.0
  %335 = vmatprep.mubr.f32.mxu0 0.0
  %336 = vmatmul.mubr.f32.gmra.mrb[0].mxu0 %v269
  %v337 = vpop.f32.mrb[0].mxu0
  %v338 = vadd.f32 %v266, %v337
  %v339 = vpop.f32.mrb[0].mxu0
  %340 = vdwg.mxu0
  %v341 = vmax.f32 %v338, 0.0
  %v342 = vld [vmem:[%s9] sm:$0xff]
  %v343 = vld [vmem:[%s9 + $0x8] sm:$0xff]
  %v344 = vld [vmem:[%s9 + $0x10] sm:$0xff]
  %v345 = vld [vmem:[%s9 + $0x18] sm:$0xff]
  %v346 = vld [vmem:[%s9 + $0x20] sm:$0xff]
  %v347 = vld [vmem:[%s9 + $0x28] sm:$0xff]
  %v348 = vld [vmem:[%s9 + $0x30] sm:$0xff]
  %v349 = vld [vmem:[%s9 + $0x38] sm:$0xff]
  %v350 = vld [vmem:[%s9 + $0x40] sm:$0xff]
  %v351 = vld [vmem:[%s9 + $0x48] sm:$0xff]
  %v352 = vld [vmem:[%s9 + $0x50] sm:$0xff]
  %v353 = vld [vmem:[%s9 + $0x58] sm:$0xff]
  %v354 = vld [vmem:[%s9 + $0x60] sm:$0xff]
  %v355 = vld [vmem:[%s9 + $0x68] sm:$0xff]
  %v356 = vld [vmem:[%s9 + $0x70] sm:$0xff]
  %v357 = vld [vmem:[%s9 + $0x78] sm:$0xff]
  %v358 = vld [vmem:[%s10] sm:$0x1]
  %v360 = vlaneseq
  %v361 = vshrl.u32 %v360, 7
  %v362 = vsub.s32 0, %v361
  %v363 = vrot.slane %v358, %v362
  %365 = vmatprep.subr.mxu0 0.0
  %366 = vmatpush1.msra.mxu0 %v342
  %367 = vmatprep.subr.mxu0 0.0
  %368 = vmatpush1.msra.mxu0 %v343
  %369 = vmatprep.subr.mxu0 0.0
  %370 = vmatpush1.msra.mxu0 %v344
  %371 = vmatprep.subr.mxu0 0.0
  %372 = vmatpush1.msra.mxu0 %v345
  %373 = vmatprep.subr.mxu0 0.0
  %374 = vmatpush1.msra.mxu0 %v346
  %375 = vmatprep.subr.mxu0 0.0
  %376 = vmatpush1.msra.mxu0 %v347
  %377 = vmatprep.subr.mxu0 0.0
  %378 = vmatpush1.msra.mxu0 %v348
  %379 = vmatprep.subr.mxu0 0.0
  %380 = vmatpush1.msra.mxu0 %v349
  %381 = vmatprep.subr.mxu0 0.0
  %382 = vmatpush1.msra.mxu0 %v350
  %383 = vmatprep.subr.mxu0 0.0
  %384 = vmatpush1.msra.mxu0 %v351
  %385 = vmatprep.subr.mxu0 0.0
  %386 = vmatpush1.msra.mxu0 %v352
  %387 = vmatprep.subr.mxu0 0.0
  %388 = vmatpush1.msra.mxu0 %v353
  %389 = vmatprep.subr.mxu0 0.0
  %390 = vmatpush1.msra.mxu0 %v354
  %391 = vmatprep.subr.mxu0 0.0
  %392 = vmatpush1.msra.mxu0 %v355
  %393 = vmatprep.subr.mxu0 0.0
  %394 = vmatpush1.msra.mxu0 %v356
  %395 = vmatprep.subr.mxu0 0.0
  %396 = vmatpush1.msra.mxu0 %v357
  %397 = vmatprep.subr.mxu0 0.0
  %398 = vmatpush1.msra.mxu0 0.0
  %399 = vmatprep.subr.mxu0 0.0
  %400 = vmatpush1.msra.mxu0 0.0
  %401 = vmatprep.subr.mxu0 0.0
  %402 = vmatpush1.msra.mxu0 0.0
  %403 = vmatprep.subr.mxu0 0.0
  %404 = vmatpush1.msra.mxu0 0.0
  %405 = vmatprep.subr.mxu0 0.0
  %406 = vmatpush1.msra.mxu0 0.0
  %407 = vmatprep.subr.mxu0 0.0
  %408 = vmatpush1.msra.mxu0 0.0
  %409 = vmatprep.subr.mxu0 0.0
  %410 = vmatpush1.msra.mxu0 0.0
  %411 = vmatprep.subr.mxu0 0.0
  %412 = vmatpush1.msra.mxu0 0.0
  %413 = vmatprep.subr.mxu0 0.0
  %414 = vmatpush1.msra.mxu0 0.0
  %415 = vmatprep.subr.mxu0 0.0
  %416 = vmatpush1.msra.mxu0 0.0
  %417 = vmatprep.subr.mxu0 0.0
  %418 = vmatpush1.msra.mxu0 0.0
  %419 = vmatprep.subr.mxu0 0.0
  %420 = vmatpush1.msra.mxu0 0.0
  %421 = vmatprep.subr.mxu0 0.0
  %422 = vmatpush1.msra.mxu0 0.0
  %423 = vmatprep.subr.mxu0 0.0
  %424 = vmatpush1.msra.mxu0 0.0
  %425 = vmatprep.subr.mxu0 0.0
  %426 = vmatpush1.msra.mxu0 0.0
  %427 = vmatprep.subr.mxu0 0.0
  %428 = vmatpush1.msra.mxu0 0.0
  %429 = vmatprep.mubr.f32.mxu0 0.0
  %430 = vmatmul.mubr.f32.gmra.mrb[0].mxu0 %v341
  %v431 = vpop.f32.mrb[0].mxu0
  %v432 = vadd.f32 %v363, %v431
  %v433 = vpop.f32.mrb[0].mxu0
  %434 = vdwg.mxu0
  %v435 = vadd.f32 %v256, %v432
  %v436 = vld [vmem:[%s11] sm:$0x1]
  %v437 = vld [vmem:[%s12] sm:$0x1]
  %v438 = vsel %vm152, %v435, 0.0
  %439 = vadd.xlane.f32.xlu0 %v438
  %v440 = vpop.xlane.xlu0 %439
  %v441 = vmul.f32 %v440, %v232
  %v442 = vsub.f32 %v435, %v441
  %v443 = vmul.f32 %v442, %v442
  %v444 = vsel %vm152, %v443, 0.0
  %445 = vadd.xlane.f32.xlu0 %v444
  %v446 = vpop.xlane.xlu0 %445
  %v447 = vmul.f32 %v446, %v232
  %v448 = vadd.f32 %v447, 1e-05
  %v449 = vrsqrt.pop %v448
  %v450 = vmul.f32 %v442, %v449
  %v452 = vlaneseq
  %v453 = vshrl.u32 %v452, 7
  %v454 = vsub.s32 0, %v453
  %v455 = vrot.slane %v436, %v454
  %v457 = vmul.f32 %v450, %v455
  %v459 = vlaneseq
  %v460 = vshrl.u32 %v459, 7
  %v461 = vsub.s32 0, %v460
  %v462 = vrot.slane %v437, %v461
  %v464 = vadd.f32 %v457, %v462
  %s465 = scalar_lea.vmem %s3, 32
  %v466 = vld [vmem:[%s465] sm:$0xff]
  %v467 = vld [vmem:[%s465 + $0x8] sm:$0xff]
  %v468 = vld [vmem:[%s465 + $0x10] sm:$0xff]
  %v469 = vld [vmem:[%s465 + $0x18] sm:$0xff]
  %s470 = scalar_lea.vmem %s4, 1
  %v471 = vld [vmem:[%s470] sm:$0x1]
  %v473 = vlaneseq
  %v474 = vshrl.u32 %v473, 7
  %v475 = vsub.s32 0, %v474
  %v476 = vrot.slane %v471, %v475
  %v479 = vsel %vm152, %v464, 0
  %481 = vmatprep.subr.mxu0 0.0
  %482 = vmatpush1.msra.mxu0 %v466
  %483 = vmatprep.subr.mxu0 0.0
  %484 = vmatpush1.msra.mxu0 %v467
  %485 = vmatprep.subr.mxu0 0.0
  %486 = vmatpush1.msra.mxu0 %v468
  %487 = vmatprep.subr.mxu0 0.0
  %488 = vmatpush1.msra.mxu0 %v469
  %489 = vmatprep.subr.mxu0 0.0
  %490 = vmatpush1.msra.mxu0 0.0
  %491 = vmatprep.subr.mxu0 0.0
  %492 = vmatpush1.msra.mxu0 0.0
  %493 = vmatprep.subr.mxu0 0.0
  %494 = vmatpush1.msra.mxu0 0.0
  %495 = vmatprep.subr.mxu0 0.0
  %496 = vmatpush1.msra.mxu0 0.0
  %497 = vmatprep.subr.mxu0 0.0
  %498 = vmatpush1.msra.mxu0 0.0
  %499 = vmatprep.subr.mxu0 0.0
  %500 = vmatpush1.msra.mxu0 0.0
  %501 = vmatprep.subr.mxu0 0.0
  %502 = vmatpush1.msra.mxu0 0.0
  %503 = vmatprep.subr.mxu0 0.0
  %504 = vmatpush1.msra.mxu0 0.0
  %505 = vmatprep.subr.mxu0 0.0
  %506 = vmatpush1.msra.mxu0 0.0
  %507 = vmatprep.subr.mxu0 0.0
  %508 = vmatpush1.msra.mxu0 0.0
  %509 = vmatprep.subr.mxu0 0.0
  %510 = vmatpush1.msra.mxu0 0.0
  %511 = vmatprep.subr.mxu0 0.0
  %512 = vmatpush1.msra.mxu0 0.0
  %513 = vmatprep.subr.mxu0 0.0
  %514 = vmatpush1.msra.mxu0 0.0
  %515 = vmatprep.subr.mxu0 0.0
  %516 = vmatpush1.msra.mxu0 0.0
  %517 = vmatprep.subr.mxu0 0.0
  %518 = vmatpush1.msra.mxu0 0.0
  %519 = vmatprep.subr.mxu0 0.0
  %520 = vmatpush1.msra.mxu0 0.0
  %521 = vmatprep.subr.mxu0 0.0
  %522 = vmatpush1.msra.mxu0 0.0
  %523 = vmatprep.subr.mxu0 0.0
  %524 = vmatpush1.msra.mxu0 0.0
  %525 = vmatprep.subr.mxu0 0.0
  %526 = vmatpush1.msra.mxu0 0.0
  %527 = vmatprep.subr.mxu0 0.0
  %528 = vmatpush1.msra.mxu0 0.0
  %529 = vmatprep.subr.mxu0 0.0
  %530 = vmatpush1.msra.mxu0 0.0
  %531 = vmatprep.subr.mxu0 0.0
  %532 = vmatpush1.msra.mxu0 0.0
  %533 = vmatprep.subr.mxu0 0.0
  %534 = vmatpush1.msra.mxu0 0.0
  %535 = vmatprep.subr.mxu0 0.0
  %536 = vmatpush1.msra.mxu0 0.0
  %537 = vmatprep.subr.mxu0 0.0
  %538 = vmatpush1.msra.mxu0 0.0
  %539 = vmatprep.subr.mxu0 0.0
  %540 = vmatpush1.msra.mxu0 0.0
  %541 = vmatprep.subr.mxu0 0.0
  %542 = vmatpush1.msra.mxu0 0.0
  %543 = vmatprep.subr.mxu0 0.0
  %544 = vmatpush1.msra.mxu0 0.0
  %545 = vmatprep.mubr.f32.mxu0 0.0
  %546 = vmatmul.mubr.f32.gmra.mrb[0].mxu0 %v479
  %v547 = vpop.f32.mrb[0].mxu0
  %v548 = vadd.f32 %v476, %v547
  %v549 = vpop.f32.mrb[0].mxu0
  %550 = vdwg.mxu0
  %v551 = vadd.f32 %v464, %v548
  %s552 = scalar_lea.vmem %s5, 1
  %v553 = vld [vmem:[%s552] sm:$0x1]
  %s554 = scalar_lea.vmem %s6, 1
  %v555 = vld [vmem:[%s554] sm:$0x1]
  %v556 = vsel %vm152, %v551, 0.0
  %557 = vadd.xlane.f32.xlu0 %v556
  %v558 = vpop.xlane.xlu0 %557
  %v559 = vmul.f32 %v558, %v232
  %v560 = vsub.f32 %v551, %v559
  %v561 = vmul.f32 %v560, %v560
  %v562 = vsel %vm152, %v561, 0.0
  %563 = vadd.xlane.f32.xlu0 %v562
  %v564 = vpop.xlane.xlu0 %563
  %v565 = vmul.f32 %v564, %v232
  %v566 = vadd.f32 %v565, 1e-05
  %v567 = vrsqrt.pop %v566
  %v568 = vmul.f32 %v560, %v567
  %v570 = vlaneseq
  %v571 = vshrl.u32 %v570, 7
  %v572 = vsub.s32 0, %v571
  %v573 = vrot.slane %v553, %v572
  %v575 = vmul.f32 %v568, %v573
  %v577 = vlaneseq
  %v578 = vshrl.u32 %v577, 7
  %v579 = vsub.s32 0, %v578
  %v580 = vrot.slane %v555, %v579
  %v582 = vadd.f32 %v575, %v580
  %s583 = scalar_lea.vmem %s7, 32
  %v584 = vld [vmem:[%s583] sm:$0xff]
  %v585 = vld [vmem:[%s583 + $0x8] sm:$0xff]
  %v586 = vld [vmem:[%s583 + $0x10] sm:$0xff]
  %v587 = vld [vmem:[%s583 + $0x18] sm:$0xff]
  %s588 = scalar_lea.vmem %s8, 1
  %v589 = vld [vmem:[%s588] sm:$0x1]
  %v591 = vlaneseq
  %v592 = vshrl.u32 %v591, 7
  %v593 = vsub.s32 0, %v592
  %v594 = vrot.slane %v589, %v593
  %v597 = vsel %vm152, %v582, 0
  %599 = vmatprep.subr.mxu0 0.0
  %600 = vmatpush1.msra.mxu0 %v584
  %601 = vmatprep.subr.mxu0 0.0
  %602 = vmatpush1.msra.mxu0 %v585
  %603 = vmatprep.subr.mxu0 0.0
  %604 = vmatpush1.msra.mxu0 %v586
  %605 = vmatprep.subr.mxu0 0.0
  %606 = vmatpush1.msra.mxu0 %v587
  %607 = vmatprep.subr.mxu0 0.0
  %608 = vmatpush1.msra.mxu0 0.0
  %609 = vmatprep.subr.mxu0 0.0
  %610 = vmatpush1.msra.mxu0 0.0
  %611 = vmatprep.subr.mxu0 0.0
  %612 = vmatpush1.msra.mxu0 0.0
  %613 = vmatprep.subr.mxu0 0.0
  %614 = vmatpush1.msra.mxu0 0.0
  %615 = vmatprep.subr.mxu0 0.0
  %616 = vmatpush1.msra.mxu0 0.0
  %617 = vmatprep.subr.mxu0 0.0
  %618 = vmatpush1.msra.mxu0 0.0
  %619 = vmatprep.subr.mxu0 0.0
  %620 = vmatpush1.msra.mxu0 0.0
  %621 = vmatprep.subr.mxu0 0.0
  %622 = vmatpush1.msra.mxu0 0.0
  %623 = vmatprep.subr.mxu0 0.0
  %624 = vmatpush1.msra.mxu0 0.0
  %625 = vmatprep.subr.mxu0 0.0
  %626 = vmatpush1.msra.mxu0 0.0
  %627 = vmatprep.subr.mxu0 0.0
  %628 = vmatpush1.msra.mxu0 0.0
  %629 = vmatprep.subr.mxu0 0.0
  %630 = vmatpush1.msra.mxu0 0.0
  %631 = vmatprep.subr.mxu0 0.0
  %632 = vmatpush1.msra.mxu0 0.0
  %633 = vmatprep.subr.mxu0 0.0
  %634 = vmatpush1.msra.mxu0 0.0
  %635 = vmatprep.subr.mxu0 0.0
  %636 = vmatpush1.msra.mxu0 0.0
  %637 = vmatprep.subr.mxu0 0.0
  %638 = vmatpush1.msra.mxu0 0.0
  %639 = vmatprep.subr.mxu0 0.0
  %640 = vmatpush1.msra.mxu0 0.0
  %641 = vmatprep.subr.mxu0 0.0
  %642 = vmatpush1.msra.mxu0 0.0
  %643 = vmatprep.subr.mxu0 0.0
  %644 = vmatpush1.msra.mxu0 0.0
  %645 = vmatprep.subr.mxu0 0.0
  %646 = vmatpush1.msra.mxu0 0.0
  %647 = vmatprep.subr.mxu0 0.0
  %648 = vmatpush1.msra.mxu0 0.0
  %649 = vmatprep.subr.mxu0 0.0
  %650 = vmatpush1.msra.mxu0 0.0
  %651 = vmatprep.subr.mxu0 0.0
  %652 = vmatpush1.msra.mxu0 0.0
  %653 = vmatprep.subr.mxu0 0.0
  %654 = vmatpush1.msra.mxu0 0.0
  %655 = vmatprep.subr.mxu0 0.0
  %656 = vmatpush1.msra.mxu0 0.0
  %657 = vmatprep.subr.mxu0 0.0
  %658 = vmatpush1.msra.mxu0 0.0
  %659 = vmatprep.subr.mxu0 0.0
  %660 = vmatpush1.msra.mxu0 0.0
  %661 = vmatprep.subr.mxu0 0.0
  %662 = vmatpush1.msra.mxu0 0.0
  %663 = vmatprep.mubr.f32.mxu0 0.0
  %664 = vmatmul.mubr.f32.gmra.mrb[0].mxu0 %v597
  %v665 = vpop.f32.mrb[0].mxu0
  %v666 = vadd.f32 %v594, %v665
  %v667 = vpop.f32.mrb[0].mxu0
  %668 = vdwg.mxu0
  %v669 = vmax.f32 %v666, 0.0
  %s670 = scalar_lea.vmem %s9, 128
  %v671 = vld [vmem:[%s670] sm:$0xff]
  %v672 = vld [vmem:[%s670 + $0x8] sm:$0xff]
  %v673 = vld [vmem:[%s670 + $0x10] sm:$0xff]
  %v674 = vld [vmem:[%s670 + $0x18] sm:$0xff]
  %v675 = vld [vmem:[%s670 + $0x20] sm:$0xff]
  %v676 = vld [vmem:[%s670 + $0x28] sm:$0xff]
  %v677 = vld [vmem:[%s670 + $0x30] sm:$0xff]
  %v678 = vld [vmem:[%s670 + $0x38] sm:$0xff]
  %v679 = vld [vmem:[%s670 + $0x40] sm:$0xff]
  %v680 = vld [vmem:[%s670 + $0x48] sm:$0xff]
  %v681 = vld [vmem:[%s670 + $0x50] sm:$0xff]
  %v682 = vld [vmem:[%s670 + $0x58] sm:$0xff]
  %v683 = vld [vmem:[%s670 + $0x60] sm:$0xff]
  %v684 = vld [vmem:[%s670 + $0x68] sm:$0xff]
  %v685 = vld [vmem:[%s670 + $0x70] sm:$0xff]
  %v686 = vld [vmem:[%s670 + $0x78] sm:$0xff]
  %s687 = scalar_lea.vmem %s10, 1
  %v688 = vld [vmem:[%s687] sm:$0x1]
  %v690 = vlaneseq
  %v691 = vshrl.u32 %v690, 7
  %v692 = vsub.s32 0, %v691
  %v693 = vrot.slane %v688, %v692
  %695 = vmatprep.subr.mxu0 0.0
  %696 = vmatpush1.msra.mxu0 %v671
  %697 = vmatprep.subr.mxu0 0.0
  %698 = vmatpush1.msra.mxu0 %v672
  %699 = vmatprep.subr.mxu0 0.0
  %700 = vmatpush1.msra.mxu0 %v673
  %701 = vmatprep.subr.mxu0 0.0
  %702 = vmatpush1.msra.mxu0 %v674
  %703 = vmatprep.subr.mxu0 0.0
  %704 = vmatpush1.msra.mxu0 %v675
  %705 = vmatprep.subr.mxu0 0.0
  %706 = vmatpush1.msra.mxu0 %v676
  %707 = vmatprep.subr.mxu0 0.0
  %708 = vmatpush1.msra.mxu0 %v677
  %709 = vmatprep.subr.mxu0 0.0
  %710 = vmatpush1.msra.mxu0 %v678
  %711 = vmatprep.subr.mxu0 0.0
  %712 = vmatpush1.msra.mxu0 %v679
  %713 = vmatprep.subr.mxu0 0.0
  %714 = vmatpush1.msra.mxu0 %v680
  %715 = vmatprep.subr.mxu0 0.0
  %716 = vmatpush1.msra.mxu0 %v681
  %717 = vmatprep.subr.mxu0 0.0
  %718 = vmatpush1.msra.mxu0 %v682
  %719 = vmatprep.subr.mxu0 0.0
  %720 = vmatpush1.msra.mxu0 %v683
  %721 = vmatprep.subr.mxu0 0.0
  %722 = vmatpush1.msra.mxu0 %v684
  %723 = vmatprep.subr.mxu0 0.0
  %724 = vmatpush1.msra.mxu0 %v685
  %725 = vmatprep.subr.mxu0 0.0
  %726 = vmatpush1.msra.mxu0 %v686
  %727 = vmatprep.subr.mxu0 0.0
  %728 = vmatpush1.msra.mxu0 0.0
  %729 = vmatprep.subr.mxu0 0.0
  %730 = vmatpush1.msra.mxu0 0.0
  %731 = vmatprep.subr.mxu0 0.0
  %732 = vmatpush1.msra.mxu0 0.0
  %733 = vmatprep.subr.mxu0 0.0
  %734 = vmatpush1.msra.mxu0 0.0
  %735 = vmatprep.subr.mxu0 0.0
  %736 = vmatpush1.msra.mxu0 0.0
  %737 = vmatprep.subr.mxu0 0.0
  %738 = vmatpush1.msra.mxu0 0.0
  %739 = vmatprep.subr.mxu0 0.0
  %740 = vmatpush1.msra.mxu0 0.0
  %741 = vmatprep.subr.mxu0 0.0
  %742 = vmatpush1.msra.mxu0 0.0
  %743 = vmatprep.subr.mxu0 0.0
  %744 = vmatpush1.msra.mxu0 0.0
  %745 = vmatprep.subr.mxu0 0.0
  %746 = vmatpush1.msra.mxu0 0.0
  %747 = vmatprep.subr.mxu0 0.0
  %748 = vmatpush1.msra.mxu0 0.0
  %749 = vmatprep.subr.mxu0 0.0
  %750 = vmatpush1.msra.mxu0 0.0
  %751 = vmatprep.subr.mxu0 0.0
  %752 = vmatpush1.msra.mxu0 0.0
  %753 = vmatprep.subr.mxu0 0.0
  %754 = vmatpush1.msra.mxu0 0.0
  %755 = vmatprep.subr.mxu0 0.0
  %756 = vmatpush1.msra.mxu0 0.0
  %757 = vmatprep.subr.mxu0 0.0
  %758 = vmatpush1.msra.mxu0 0.0
  %759 = vmatprep.mubr.f32.mxu0 0.0
  %760 = vmatmul.mubr.f32.gmra.mrb[0].mxu0 %v669
  %v761 = vpop.f32.mrb[0].mxu0
  %v762 = vadd.f32 %v693, %v761
  %v763 = vpop.f32.mrb[0].mxu0
  %764 = vdwg.mxu0
  %v765 = vadd.f32 %v582, %v762
  %s766 = scalar_lea.vmem %s11, 1
  %v767 = vld [vmem:[%s766] sm:$0x1]
  %s768 = scalar_lea.vmem %s12, 1
  %v769 = vld [vmem:[%s768] sm:$0x1]
  %v770 = vsel %vm152, %v765, 0.0
  %771 = vadd.xlane.f32.xlu0 %v770
  %v772 = vpop.xlane.xlu0 %771
  %v773 = vmul.f32 %v772, %v232
  %v774 = vsub.f32 %v765, %v773
  %v775 = vmul.f32 %v774, %v774
  %v776 = vsel %vm152, %v775, 0.0
  %777 = vadd.xlane.f32.xlu0 %v776
  %v778 = vpop.xlane.xlu0 %777
  %v779 = vmul.f32 %v778, %v232
  %v780 = vadd.f32 %v779, 1e-05
  %v781 = vrsqrt.pop %v780
  %v782 = vmul.f32 %v774, %v781
  %v784 = vlaneseq
  %v785 = vshrl.u32 %v784, 7
  %v786 = vsub.s32 0, %v785
  %v787 = vrot.slane %v767, %v786
  %v789 = vmul.f32 %v782, %v787
  %v791 = vlaneseq
  %v792 = vshrl.u32 %v791, 7
  %v793 = vsub.s32 0, %v792
  %v794 = vrot.slane %v769, %v793
  %v796 = vadd.f32 %v789, %v794
  %v797 = vld [vmem:[%s13] sm:$0xff]
  %v798 = vld [vmem:[%s13 + $0x8] sm:$0xff]
  %v799 = vld [vmem:[%s13 + $0x10] sm:$0xff]
  %v800 = vld [vmem:[%s13 + $0x18] sm:$0xff]
  %v801 = vld [vmem:[%s14] sm:$0x1]
  %v803 = vlaneseq
  %v804 = vshrl.u32 %v803, 7
  %v805 = vsub.s32 0, %v804
  %v806 = vrot.slane %v801, %v805
  %v809 = vsel %vm152, %v796, 0
  %811 = vmatprep.subr.mxu0 0.0
  %812 = vmatpush1.msra.mxu0 %v797
  %813 = vmatprep.subr.mxu0 0.0
  %814 = vmatpush1.msra.mxu0 %v798
  %815 = vmatprep.subr.mxu0 0.0
  %816 = vmatpush1.msra.mxu0 %v799
  %817 = vmatprep.subr.mxu0 0.0
  %818 = vmatpush1.msra.mxu0 %v800
  %819 = vmatprep.subr.mxu0 0.0
  %820 = vmatpush1.msra.mxu0 0.0
  %821 = vmatprep.subr.mxu0 0.0
  %822 = vmatpush1.msra.mxu0 0.0
  %823 = vmatprep.subr.mxu0 0.0
  %824 = vmatpush1.msra.mxu0 0.0
  %825 = vmatprep.subr.mxu0 0.0
  %826 = vmatpush1.msra.mxu0 0.0
  %827 = vmatprep.subr.mxu0 0.0
  %828 = vmatpush1.msra.mxu0 0.0
  %829 = vmatprep.subr.mxu0 0.0
  %830 = vmatpush1.msra.mxu0 0.0
  %831 = vmatprep.subr.mxu0 0.0
  %832 = vmatpush1.msra.mxu0 0.0
  %833 = vmatprep.subr.mxu0 0.0
  %834 = vmatpush1.msra.mxu0 0.0
  %835 = vmatprep.subr.mxu0 0.0
  %836 = vmatpush1.msra.mxu0 0.0
  %837 = vmatprep.subr.mxu0 0.0
  %838 = vmatpush1.msra.mxu0 0.0
  %839 = vmatprep.subr.mxu0 0.0
  %840 = vmatpush1.msra.mxu0 0.0
  %841 = vmatprep.subr.mxu0 0.0
  %842 = vmatpush1.msra.mxu0 0.0
  %843 = vmatprep.subr.mxu0 0.0
  %844 = vmatpush1.msra.mxu0 0.0
  %845 = vmatprep.subr.mxu0 0.0
  %846 = vmatpush1.msra.mxu0 0.0
  %847 = vmatprep.subr.mxu0 0.0
  %848 = vmatpush1.msra.mxu0 0.0
  %849 = vmatprep.subr.mxu0 0.0
  %850 = vmatpush1.msra.mxu0 0.0
  %851 = vmatprep.subr.mxu0 0.0
  %852 = vmatpush1.msra.mxu0 0.0
  %853 = vmatprep.subr.mxu0 0.0
  %854 = vmatpush1.msra.mxu0 0.0
  %855 = vmatprep.subr.mxu0 0.0
  %856 = vmatpush1.msra.mxu0 0.0
  %857 = vmatprep.subr.mxu0 0.0
  %858 = vmatpush1.msra.mxu0 0.0
  %859 = vmatprep.subr.mxu0 0.0
  %860 = vmatpush1.msra.mxu0 0.0
  %861 = vmatprep.subr.mxu0 0.0
  %862 = vmatpush1.msra.mxu0 0.0
  %863 = vmatprep.subr.mxu0 0.0
  %864 = vmatpush1.msra.mxu0 0.0
  %865 = vmatprep.subr.mxu0 0.0
  %866 = vmatpush1.msra.mxu0 0.0
  %867 = vmatprep.subr.mxu0 0.0
  %868 = vmatpush1.msra.mxu0 0.0
  %869 = vmatprep.subr.mxu0 0.0
  %870 = vmatpush1.msra.mxu0 0.0
  %871 = vmatprep.subr.mxu0 0.0
  %872 = vmatpush1.msra.mxu0 0.0
  %873 = vmatprep.subr.mxu0 0.0
  %874 = vmatpush1.msra.mxu0 0.0
  %875 = vmatprep.mubr.f32.mxu0 0.0
  %876 = vmatmul.mubr.f32.gmra.mrb[0].mxu0 %v809
  %v877 = vpop.f32.mrb[0].mxu0
  %v878 = vadd.f32 %v806, %v877
  %v879 = vpop.f32.mrb[0].mxu0
  %880 = vdwg.mxu0
  %s881 = scalar_lea.vmem %s1, 40
  %v882 = vld [vmem:[%s881] sm:$0xff]
  %v883 = vld [vmem:[%s881 + $0x8] sm:$0xff]
  %v884 = vld [vmem:[%s881 + $0x10] sm:$0xff]
  %v885 = vld [vmem:[%s881 + $0x18] sm:$0xff]
  %v886 = vld [vmem:[%s881 + $0x20] sm:$0x3f]
  %s887 = scalar_lea.vmem %s2, 1
  %v888 = vld [vmem:[%s887] sm:$0x1]
  %v890 = vlaneseq
  %v891 = vshrl.u32 %v890, 7
  %v892 = vsub.s32 0, %v891
  %v893 = vrot.slane %v888, %v892
  %v896 = vsel %vm67, %v886, 0
  %898 = vmatprep.subr.mxu0 0.0
  %899 = vmatpush1.msra.mxu0 %v882
  %900 = vmatprep.subr.mxu0 0.0
  %901 = vmatpush1.msra.mxu0 %v883
  %902 = vmatprep.subr.mxu0 0.0
  %903 = vmatpush1.msra.mxu0 %v884
  %904 = vmatprep.subr.mxu0 0.0
  %905 = vmatpush1.msra.mxu0 %v885
  %906 = vmatprep.subr.mxu0 0.0
  %907 = vmatpush1.msra.mxu0 %v896
  %908 = vmatprep.subr.mxu0 0.0
  %909 = vmatpush1.msra.mxu0 0.0
  %910 = vmatprep.subr.mxu0 0.0
  %911 = vmatpush1.msra.mxu0 0.0
  %912 = vmatprep.subr.mxu0 0.0
  %913 = vmatpush1.msra.mxu0 0.0
  %914 = vmatprep.subr.mxu0 0.0
  %915 = vmatpush1.msra.mxu0 0.0
  %916 = vmatprep.subr.mxu0 0.0
  %917 = vmatpush1.msra.mxu0 0.0
  %918 = vmatprep.subr.mxu0 0.0
  %919 = vmatpush1.msra.mxu0 0.0
  %920 = vmatprep.subr.mxu0 0.0
  %921 = vmatpush1.msra.mxu0 0.0
  %922 = vmatprep.subr.mxu0 0.0
  %923 = vmatpush1.msra.mxu0 0.0
  %924 = vmatprep.subr.mxu0 0.0
  %925 = vmatpush1.msra.mxu0 0.0
  %926 = vmatprep.subr.mxu0 0.0
  %927 = vmatpush1.msra.mxu0 0.0
  %928 = vmatprep.subr.mxu0 0.0
  %929 = vmatpush1.msra.mxu0 0.0
  %930 = vmatprep.subr.mxu0 0.0
  %931 = vmatpush1.msra.mxu0 0.0
  %932 = vmatprep.subr.mxu0 0.0
  %933 = vmatpush1.msra.mxu0 0.0
  %934 = vmatprep.subr.mxu0 0.0
  %935 = vmatpush1.msra.mxu0 0.0
  %936 = vmatprep.subr.mxu0 0.0
  %937 = vmatpush1.msra.mxu0 0.0
  %938 = vmatprep.subr.mxu0 0.0
  %939 = vmatpush1.msra.mxu0 0.0
  %940 = vmatprep.subr.mxu0 0.0
  %941 = vmatpush1.msra.mxu0 0.0
  %942 = vmatprep.subr.mxu0 0.0
  %943 = vmatpush1.msra.mxu0 0.0
  %944 = vmatprep.subr.mxu0 0.0
  %945 = vmatpush1.msra.mxu0 0.0
  %946 = vmatprep.subr.mxu0 0.0
  %947 = vmatpush1.msra.mxu0 0.0
  %948 = vmatprep.subr.mxu0 0.0
  %949 = vmatpush1.msra.mxu0 0.0
  %950 = vmatprep.subr.mxu0 0.0
  %951 = vmatpush1.msra.mxu0 0.0
  %952 = vmatprep.subr.mxu0 0.0
  %953 = vmatpush1.msra.mxu0 0.0
  %954 = vmatprep.subr.mxu0 0.0
  %955 = vmatpush1.msra.mxu0 0.0
  %956 = vmatprep.subr.mxu0 0.0
  %957 = vmatpush1.msra.mxu0 0.0
  %958 = vmatprep.subr.mxu0 0.0
  %959 = vmatpush1.msra.mxu0 0.0
  %960 = vmatprep.subr.mxu0 0.0
  %961 = vmatpush1.msra.mxu0 0.0
  %962 = vmatprep.mubr.f32.mxu0 0.0
  %963 = vmatmul.mubr.f32.gmra.mrb[0].mxu0 %v65
  %v964 = vpop.f32.mrb[0].mxu0
  %v965 = vadd.f32 %v893, %v964
  %v966 = vpop.f32.mrb[0].mxu0
  %967 = vdwg.mxu0
  %s968 = scalar_lea.vmem %s3, 64
  %v969 = vld [vmem:[%s968] sm:$0xff]
  %v970 = vld [vmem:[%s968 + $0x8] sm:$0xff]
  %v971 = vld [vmem:[%s968 + $0x10] sm:$0xff]
  %v972 = vld [vmem:[%s968 + $0x18] sm:$0xff]
  %s973 = scalar_lea.vmem %s4, 2
  %v974 = vld [vmem:[%s973] sm:$0x1]
  %v976 = vlaneseq
  %v977 = vshrl.u32 %v976, 7
  %v978 = vsub.s32 0, %v977
  %v979 = vrot.slane %v974, %v978
  %v982 = vsel %vm152, %v965, 0
  %984 = vmatprep.subr.mxu0 0.0
  %985 = vmatpush1.msra.mxu0 %v969
  %986 = vmatprep.subr.mxu0 0.0
  %987 = vmatpush1.msra.mxu0 %v970
  %988 = vmatprep.subr.mxu0 0.0
  %989 = vmatpush1.msra.mxu0 %v971
  %990 = vmatprep.subr.mxu0 0.0
  %991 = vmatpush1.msra.mxu0 %v972
  %992 = vmatprep.subr.mxu0 0.0
  %993 = vmatpush1.msra.mxu0 0.0
  %994 = vmatprep.subr.mxu0 0.0
  %995 = vmatpush1.msra.mxu0 0.0
  %996 = vmatprep.subr.mxu0 0.0
  %997 = vmatpush1.msra.mxu0 0.0
  %998 = vmatprep.subr.mxu0 0.0
  %999 = vmatpush1.msra.mxu0 0.0
  %1000 = vmatprep.subr.mxu0 0.0
  %1001 = vmatpush1.msra.mxu0 0.0
  %1002 = vmatprep.subr.mxu0 0.0
  %1003 = vmatpush1.msra.mxu0 0.0
  %1004 = vmatprep.subr.mxu0 0.0
  %1005 = vmatpush1.msra.mxu0 0.0
  %1006 = vmatprep.subr.mxu0 0.0
  %1007 = vmatpush1.msra.mxu0 0.0
  %1008 = vmatprep.subr.mxu0 0.0
  %1009 = vmatpush1.msra.mxu0 0.0
  %1010 = vmatprep.subr.mxu0 0.0
  %1011 = vmatpush1.msra.mxu0 0.0
  %1012 = vmatprep.subr.mxu0 0.0
  %1013 = vmatpush1.msra.mxu0 0.0
  %1014 = vmatprep.subr.mxu0 0.0
  %1015 = vmatpush1.msra.mxu0 0.0
  %1016 = vmatprep.subr.mxu0 0.0
  %1017 = vmatpush1.msra.mxu0 0.0
  %1018 = vmatprep.subr.mxu0 0.0
  %1019 = vmatpush1.msra.mxu0 0.0
  %1020 = vmatprep.subr.mxu0 0.0
  %1021 = vmatpush1.msra.mxu0 0.0
  %1022 = vmatprep.subr.mxu0 0.0
  %1023 = vmatpush1.msra.mxu0 0.0
  %1024 = vmatprep.subr.mxu0 0.0
  %1025 = vmatpush1.msra.mxu0 0.0
  %1026 = vmatprep.subr.mxu0 0.0
  %1027 = vmatpush1.msra.mxu0 0.0
  %1028 = vmatprep.subr.mxu0 0.0
  %1029 = vmatpush1.msra.mxu0 0.0
  %1030 = vmatprep.subr.mxu0 0.0
  %1031 = vmatpush1.msra.mxu0 0.0
  %1032 = vmatprep.subr.mxu0 0.0
  %1033 = vmatpush1.msra.mxu0 0.0
  %1034 = vmatprep.subr.mxu0 0.0
  %1035 = vmatpush1.msra.mxu0 0.0
  %1036 = vmatprep.subr.mxu0 0.0
  %1037 = vmatpush1.msra.mxu0 0.0
  %1038 = vmatprep.subr.mxu0 0.0
  %1039 = vmatpush1.msra.mxu0 0.0
  %1040 = vmatprep.subr.mxu0 0.0
  %1041 = vmatpush1.msra.mxu0 0.0
  %1042 = vmatprep.subr.mxu0 0.0
  %1043 = vmatpush1.msra.mxu0 0.0
  %1044 = vmatprep.subr.mxu0 0.0
  %1045 = vmatpush1.msra.mxu0 0.0
  %1046 = vmatprep.subr.mxu0 0.0
  %1047 = vmatpush1.msra.mxu0 0.0
  %1048 = vmatprep.mubr.f32.mxu0 0.0
  %1049 = vmatmul.mubr.f32.gmra.mrb[0].mxu0 %v982
  %v1050 = vpop.f32.mrb[0].mxu0
  %v1051 = vadd.f32 %v979, %v1050
  %v1052 = vpop.f32.mrb[0].mxu0
  %1053 = vdwg.mxu0
  %v1054 = vadd.f32 %v965, %v1051
  %s1055 = scalar_lea.vmem %s5, 2
  %v1056 = vld [vmem:[%s1055] sm:$0x1]
  %s1057 = scalar_lea.vmem %s6, 2
  %v1058 = vld [vmem:[%s1057] sm:$0x1]
  %v1059 = vsel %vm152, %v1054, 0.0
  %1060 = vadd.xlane.f32.xlu0 %v1059
  %v1061 = vpop.xlane.xlu0 %1060
  %v1062 = vmul.f32 %v1061, %v232
  %v1063 = vsub.f32 %v1054, %v1062
  %v1064 = vmul.f32 %v1063, %v1063
  %v1065 = vsel %vm152, %v1064, 0.0
  %1066 = vadd.xlane.f32.xlu0 %v1065
  %v1067 = vpop.xlane.xlu0 %1066
  %v1068 = vmul.f32 %v1067, %v232
  %v1069 = vadd.f32 %v1068, 1e-05
  %v1070 = vrsqrt.pop %v1069
  %v1071 = vmul.f32 %v1063, %v1070
  %v1073 = vlaneseq
  %v1074 = vshrl.u32 %v1073, 7
  %v1075 = vsub.s32 0, %v1074
  %v1076 = vrot.slane %v1056, %v1075
  %v1078 = vmul.f32 %v1071, %v1076
  %v1080 = vlaneseq
  %v1081 = vshrl.u32 %v1080, 7
  %v1082 = vsub.s32 0, %v1081
  %v1083 = vrot.slane %v1058, %v1082
  %v1085 = vadd.f32 %v1078, %v1083
  %s1086 = scalar_lea.vmem %s7, 64
  %v1087 = vld [vmem:[%s1086] sm:$0xff]
  %v1088 = vld [vmem:[%s1086 + $0x8] sm:$0xff]
  %v1089 = vld [vmem:[%s1086 + $0x10] sm:$0xff]
  %v1090 = vld [vmem:[%s1086 + $0x18] sm:$0xff]
  %s1091 = scalar_lea.vmem %s8, 2
  %v1092 = vld [vmem:[%s1091] sm:$0x1]
  %v1094 = vlaneseq
  %v1095 = vshrl.u32 %v1094, 7
  %v1096 = vsub.s32 0, %v1095
  %v1097 = vrot.slane %v1092, %v1096
  %v1100 = vsel %vm152, %v1085, 0
  %1102 = vmatprep.subr.mxu0 0.0
  %1103 = vmatpush1.msra.mxu0 %v1087
  %1104 = vmatprep.subr.mxu0 0.0
  %1105 = vmatpush1.msra.mxu0 %v1088
  %1106 = vmatprep.subr.mxu0 0.0
  %1107 = vmatpush1.msra.mxu0 %v1089
  %1108 = vmatprep.subr.mxu0 0.0
  %1109 = vmatpush1.msra.mxu0 %v1090
  %1110 = vmatprep.subr.mxu0 0.0
  %1111 = vmatpush1.msra.mxu0 0.0
  %1112 = vmatprep.subr.mxu0 0.0
  %1113 = vmatpush1.msra.mxu0 0.0
  %1114 = vmatprep.subr.mxu0 0.0
  %1115 = vmatpush1.msra.mxu0 0.0
  %1116 = vmatprep.subr.mxu0 0.0
  %1117 = vmatpush1.msra.mxu0 0.0
  %1118 = vmatprep.subr.mxu0 0.0
  %1119 = vmatpush1.msra.mxu0 0.0
  %1120 = vmatprep.subr.mxu0 0.0
  %1121 = vmatpush1.msra.mxu0 0.0
  %1122 = vmatprep.subr.mxu0 0.0
  %1123 = vmatpush1.msra.mxu0 0.0
  %1124 = vmatprep.subr.mxu0 0.0
  %1125 = vmatpush1.msra.mxu0 0.0
  %1126 = vmatprep.subr.mxu0 0.0
  %1127 = vmatpush1.msra.mxu0 0.0
  %1128 = vmatprep.subr.mxu0 0.0
  %1129 = vmatpush1.msra.mxu0 0.0
  %1130 = vmatprep.subr.mxu0 0.0
  %1131 = vmatpush1.msra.mxu0 0.0
  %1132 = vmatprep.subr.mxu0 0.0
  %1133 = vmatpush1.msra.mxu0 0.0
  %1134 = vmatprep.subr.mxu0 0.0
  %1135 = vmatpush1.msra.mxu0 0.0
  %1136 = vmatprep.subr.mxu0 0.0
  %1137 = vmatpush1.msra.mxu0 0.0
  %1138 = vmatprep.subr.mxu0 0.0
  %1139 = vmatpush1.msra.mxu0 0.0
  %1140 = vmatprep.subr.mxu0 0.0
  %1141 = vmatpush1.msra.mxu0 0.0
  %1142 = vmatprep.subr.mxu0 0.0
  %1143 = vmatpush1.msra.mxu0 0.0
  %1144 = vmatprep.subr.mxu0 0.0
  %1145 = vmatpush1.msra.mxu0 0.0
  %1146 = vmatprep.subr.mxu0 0.0
  %1147 = vmatpush1.msra.mxu0 0.0
  %1148 = vmatprep.subr.mxu0 0.0
  %1149 = vmatpush1.msra.mxu0 0.0
  %1150 = vmatprep.subr.mxu0 0.0
  %1151 = vmatpush1.msra.mxu0 0.0
  %1152 = vmatprep.subr.mxu0 0.0
  %1153 = vmatpush1.msra.mxu0 0.0
  %1154 = vmatprep.subr.mxu0 0.0
  %1155 = vmatpush1.msra.mxu0 0.0
  %1156 = vmatprep.subr.mxu0 0.0
  %1157 = vmatpush1.msra.mxu0 0.0
  %1158 = vmatprep.subr.mxu0 0.0
  %1159 = vmatpush1.msra.mxu0 0.0
  %1160 = vmatprep.subr.mxu0 0.0
  %1161 = vmatpush1.msra.mxu0 0.0
  %1162 = vmatprep.subr.mxu0 0.0
  %1163 = vmatpush1.msra.mxu0 0.0
  %1164 = vmatprep.subr.mxu0 0.0
  %1165 = vmatpush1.msra.mxu0 0.0
  %1166 = vmatprep.mubr.f32.mxu0 0.0
  %1167 = vmatmul.mubr.f32.gmra.mrb[0].mxu0 %v1100
  %v1168 = vpop.f32.mrb[0].mxu0
  %v1169 = vadd.f32 %v1097, %v1168
  %v1170 = vpop.f32.mrb[0].mxu0
  %1171 = vdwg.mxu0
  %v1172 = vmax.f32 %v1169, 0.0
  %s1173 = scalar_lea.vmem %s9, 256
  %v1174 = vld [vmem:[%s1173] sm:$0xff]
  %v1175 = vld [vmem:[%s1173 + $0x8] sm:$0xff]
  %v1176 = vld [vmem:[%s1173 + $0x10] sm:$0xff]
  %v1177 = vld [vmem:[%s1173 + $0x18] sm:$0xff]
  %v1178 = vld [vmem:[%s1173 + $0x20] sm:$0xff]
  %v1179 = vld [vmem:[%s1173 + $0x28] sm:$0xff]
  %v1180 = vld [vmem:[%s1173 + $0x30] sm:$0xff]
  %v1181 = vld [vmem:[%s1173 + $0x38] sm:$0xff]
  %v1182 = vld [vmem:[%s1173 + $0x40] sm:$0xff]
  %v1183 = vld [vmem:[%s1173 + $0x48] sm:$0xff]
  %v1184 = vld [vmem:[%s1173 + $0x50] sm:$0xff]
  %v1185 = vld [vmem:[%s1173 + $0x58] sm:$0xff]
  %v1186 = vld [vmem:[%s1173 + $0x60] sm:$0xff]
  %v1187 = vld [vmem:[%s1173 + $0x68] sm:$0xff]
  %v1188 = vld [vmem:[%s1173 + $0x70] sm:$0xff]
  %v1189 = vld [vmem:[%s1173 + $0x78] sm:$0xff]
  %s1190 = scalar_lea.vmem %s10, 2
  %v1191 = vld [vmem:[%s1190] sm:$0x1]
  %v1193 = vlaneseq
  %v1194 = vshrl.u32 %v1193, 7
  %v1195 = vsub.s32 0, %v1194
  %v1196 = vrot.slane %v1191, %v1195
  %1198 = vmatprep.subr.mxu0 0.0
  %1199 = vmatpush1.msra.mxu0 %v1174
  %1200 = vmatprep.subr.mxu0 0.0
  %1201 = vmatpush1.msra.mxu0 %v1175
  %1202 = vmatprep.subr.mxu0 0.0
  %1203 = vmatpush1.msra.mxu0 %v1176
  %1204 = vmatprep.subr.mxu0 0.0
  %1205 = vmatpush1.msra.mxu0 %v1177
  %1206 = vmatprep.subr.mxu0 0.0
  %1207 = vmatpush1.msra.mxu0 %v1178
  %1208 = vmatprep.subr.mxu0 0.0
  %1209 = vmatpush1.msra.mxu0 %v1179
  %1210 = vmatprep.subr.mxu0 0.0
  %1211 = vmatpush1.msra.mxu0 %v1180
  %1212 = vmatprep.subr.mxu0 0.0
  %1213 = vmatpush1.msra.mxu0 %v1181
  %1214 = vmatprep.subr.mxu0 0.0
  %1215 = vmatpush1.msra.mxu0 %v1182
  %1216 = vmatprep.subr.mxu0 0.0
  %1217 = vmatpush1.msra.mxu0 %v1183
  %1218 = vmatprep.subr.mxu0 0.0
  %1219 = vmatpush1.msra.mxu0 %v1184
  %1220 = vmatprep.subr.mxu0 0.0
  %1221 = vmatpush1.msra.mxu0 %v1185
  %1222 = vmatprep.subr.mxu0 0.0
  %1223 = vmatpush1.msra.mxu0 %v1186
  %1224 = vmatprep.subr.mxu0 0.0
  %1225 = vmatpush1.msra.mxu0 %v1187
  %1226 = vmatprep.subr.mxu0 0.0
  %1227 = vmatpush1.msra.mxu0 %v1188
  %1228 = vmatprep.subr.mxu0 0.0
  %1229 = vmatpush1.msra.mxu0 %v1189
  %1230 = vmatprep.subr.mxu0 0.0
  %1231 = vmatpush1.msra.mxu0 0.0
  %1232 = vmatprep.subr.mxu0 0.0
  %1233 = vmatpush1.msra.mxu0 0.0
  %1234 = vmatprep.subr.mxu0 0.0
  %1235 = vmatpush1.msra.mxu0 0.0
  %1236 = vmatprep.subr.mxu0 0.0
  %1237 = vmatpush1.msra.mxu0 0.0
  %1238 = vmatprep.subr.mxu0 0.0
  %1239 = vmatpush1.msra.mxu0 0.0
  %1240 = vmatprep.subr.mxu0 0.0
  %1241 = vmatpush1.msra.mxu0 0.0
  %1242 = vmatprep.subr.mxu0 0.0
  %1243 = vmatpush1.msra.mxu0 0.0
  %1244 = vmatprep.subr.mxu0 0.0
  %1245 = vmatpush1.msra.mxu0 0.0
  %1246 = vmatprep.subr.mxu0 0.0
  %1247 = vmatpush1.msra.mxu0 0.0
  %1248 = vmatprep.subr.mxu0 0.0
  %1249 = vmatpush1.msra.mxu0 0.0
  %1250 = vmatprep.subr.mxu0 0.0
  %1251 = vmatpush1.msra.mxu0 0.0
  %1252 = vmatprep.subr.mxu0 0.0
  %1253 = vmatpush1.msra.mxu0 0.0
  %1254 = vmatprep.subr.mxu0 0.0
  %1255 = vmatpush1.msra.mxu0 0.0
  %1256 = vmatprep.subr.mxu0 0.0
  %1257 = vmatpush1.msra.mxu0 0.0
  %1258 = vmatprep.subr.mxu0 0.0
  %1259 = vmatpush1.msra.mxu0 0.0
  %1260 = vmatprep.subr.mxu0 0.0
  %1261 = vmatpush1.msra.mxu0 0.0
  %1262 = vmatprep.mubr.f32.mxu0 0.0
  %1263 = vmatmul.mubr.f32.gmra.mrb[0].mxu0 %v1172
  %v1264 = vpop.f32.mrb[0].mxu0
  %v1265 = vadd.f32 %v1196, %v1264
  %v1266 = vpop.f32.mrb[0].mxu0
  %1267 = vdwg.mxu0
  %v1268 = vadd.f32 %v1085, %v1265
  %s1269 = scalar_lea.vmem %s11, 2
  %v1270 = vld [vmem:[%s1269] sm:$0x1]
  %s1271 = scalar_lea.vmem %s12, 2
  %v1272 = vld [vmem:[%s1271] sm:$0x1]
  %v1273 = vsel %vm152, %v1268, 0.0
  %1274 = vadd.xlane.f32.xlu0 %v1273
  %v1275 = vpop.xlane.xlu0 %1274
  %v1276 = vmul.f32 %v1275, %v232
  %v1277 = vsub.f32 %v1268, %v1276
  %v1278 = vmul.f32 %v1277, %v1277
  %v1279 = vsel %vm152, %v1278, 0.0
  %1280 = vadd.xlane.f32.xlu0 %v1279
  %v1281 = vpop.xlane.xlu0 %1280
  %v1282 = vmul.f32 %v1281, %v232
  %v1283 = vadd.f32 %v1282, 1e-05
  %v1284 = vrsqrt.pop %v1283
  %v1285 = vmul.f32 %v1277, %v1284
  %v1287 = vlaneseq
  %v1288 = vshrl.u32 %v1287, 7
  %v1289 = vsub.s32 0, %v1288
  %v1290 = vrot.slane %v1270, %v1289
  %v1292 = vmul.f32 %v1285, %v1290
  %v1294 = vlaneseq
  %v1295 = vshrl.u32 %v1294, 7
  %v1296 = vsub.s32 0, %v1295
  %v1297 = vrot.slane %v1272, %v1296
  %v1299 = vadd.f32 %v1292, %v1297
  %s1300 = scalar_lea.vmem %s3, 96
  %v1301 = vld [vmem:[%s1300] sm:$0xff]
  %v1302 = vld [vmem:[%s1300 + $0x8] sm:$0xff]
  %v1303 = vld [vmem:[%s1300 + $0x10] sm:$0xff]
  %v1304 = vld [vmem:[%s1300 + $0x18] sm:$0xff]
  %s1305 = scalar_lea.vmem %s4, 3
  %v1306 = vld [vmem:[%s1305] sm:$0x1]
  %v1308 = vlaneseq
  %v1309 = vshrl.u32 %v1308, 7
  %v1310 = vsub.s32 0, %v1309
  %v1311 = vrot.slane %v1306, %v1310
  %v1314 = vsel %vm152, %v1299, 0
  %1316 = vmatprep.subr.mxu0 0.0
  %1317 = vmatpush1.msra.mxu0 %v1301
  %1318 = vmatprep.subr.mxu0 0.0
  %1319 = vmatpush1.msra.mxu0 %v1302
  %1320 = vmatprep.subr.mxu0 0.0
  %1321 = vmatpush1.msra.mxu0 %v1303
  %1322 = vmatprep.subr.mxu0 0.0
  %1323 = vmatpush1.msra.mxu0 %v1304
  %1324 = vmatprep.subr.mxu0 0.0
  %1325 = vmatpush1.msra.mxu0 0.0
  %1326 = vmatprep.subr.mxu0 0.0
  %1327 = vmatpush1.msra.mxu0 0.0
  %1328 = vmatprep.subr.mxu0 0.0
  %1329 = vmatpush1.msra.mxu0 0.0
  %1330 = vmatprep.subr.mxu0 0.0
  %1331 = vmatpush1.msra.mxu0 0.0
  %1332 = vmatprep.subr.mxu0 0.0
  %1333 = vmatpush1.msra.mxu0 0.0
  %1334 = vmatprep.subr.mxu0 0.0
  %1335 = vmatpush1.msra.mxu0 0.0
  %1336 = vmatprep.subr.mxu0 0.0
  %1337 = vmatpush1.msra.mxu0 0.0
  %1338 = vmatprep.subr.mxu0 0.0
  %1339 = vmatpush1.msra.mxu0 0.0
  %1340 = vmatprep.subr.mxu0 0.0
  %1341 = vmatpush1.msra.mxu0 0.0
  %1342 = vmatprep.subr.mxu0 0.0
  %1343 = vmatpush1.msra.mxu0 0.0
  %1344 = vmatprep.subr.mxu0 0.0
  %1345 = vmatpush1.msra.mxu0 0.0
  %1346 = vmatprep.subr.mxu0 0.0
  %1347 = vmatpush1.msra.mxu0 0.0
  %1348 = vmatprep.subr.mxu0 0.0
  %1349 = vmatpush1.msra.mxu0 0.0
  %1350 = vmatprep.subr.mxu0 0.0
  %1351 = vmatpush1.msra.mxu0 0.0
  %1352 = vmatprep.subr.mxu0 0.0
  %1353 = vmatpush1.msra.mxu0 0.0
  %1354 = vmatprep.subr.mxu0 0.0
  %1355 = vmatpush1.msra.mxu0 0.0
  %1356 = vmatprep.subr.mxu0 0.0
  %1357 = vmatpush1.msra.mxu0 0.0
  %1358 = vmatprep.subr.mxu0 0.0
  %1359 = vmatpush1.msra.mxu0 0.0
  %1360 = vmatprep.subr.mxu0 0.0
  %1361 = vmatpush1.msra.mxu0 0.0
  %1362 = vmatprep.subr.mxu0 0.0
  %1363 = vmatpush1.msra.mxu0 0.0
  %1364 = vmatprep.subr.mxu0 0.0
  %1365 = vmatpush1.msra.mxu0 0.0
  %1366 = vmatprep.subr.mxu0 0.0
  %1367 = vmatpush1.msra.mxu0 0.0
  %1368 = vmatprep.subr.mxu0 0.0
  %1369 = vmatpush1.msra.mxu0 0.0
  %1370 = vmatprep.subr.mxu0 0.0
  %1371 = vmatpush1.msra.mxu0 0.0
  %1372 = vmatprep.subr.mxu0 0.0
  %1373 = vmatpush1.msra.mxu0 0.0
  %1374 = vmatprep.subr.mxu0 0.0
  %1375 = vmatpush1.msra.mxu0 0.0
  %1376 = vmatprep.subr.mxu0 0.0
  %1377 = vmatpush1.msra.mxu0 0.0
  %1378 = vmatprep.subr.mxu0 0.0
  %1379 = vmatpush1.msra.mxu0 0.0
  %1380 = vmatprep.mubr.f32.mxu0 0.0
  %1381 = vmatmul.mubr.f32.gmra.mrb[0].mxu0 %v1314
  %v1382 = vpop.f32.mrb[0].mxu0
  %v1383 = vadd.f32 %v1311, %v1382
  %v1384 = vpop.f32.mrb[0].mxu0
  %1385 = vdwg.mxu0
  %v1386 = vadd.f32 %v1299, %v1383
  %s1387 = scalar_lea.vmem %s5, 3
  %v1388 = vld [vmem:[%s1387] sm:$0x1]
  %s1389 = scalar_lea.vmem %s6, 3
  %v1390 = vld [vmem:[%s1389] sm:$0x1]
  %v1391 = vsel %vm152, %v1386, 0.0
  %1392 = vadd.xlane.f32.xlu0 %v1391
  %v1393 = vpop.xlane.xlu0 %1392
  %v1394 = vmul.f32 %v1393, %v232
  %v1395 = vsub.f32 %v1386, %v1394
  %v1396 = vmul.f32 %v1395, %v1395
  %v1397 = vsel %vm152, %v1396, 0.0
  %1398 = vadd.xlane.f32.xlu0 %v1397
  %v1399 = vpop.xlane.xlu0 %1398
  %v1400 = vmul.f32 %v1399, %v232
  %v1401 = vadd.f32 %v1400, 1e-05
  %v1402 = vrsqrt.pop %v1401
  %v1403 = vmul.f32 %v1395, %v1402
  %v1405 = vlaneseq
  %v1406 = vshrl.u32 %v1405, 7
  %v1407 = vsub.s32 0, %v1406
  %v1408 = vrot.slane %v1388, %v1407
  %v1410 = vmul.f32 %v1403, %v1408
  %v1412 = vlaneseq
  %v1413 = vshrl.u32 %v1412, 7
  %v1414 = vsub.s32 0, %v1413
  %v1415 = vrot.slane %v1390, %v1414
  %v1417 = vadd.f32 %v1410, %v1415
  %s1418 = scalar_lea.vmem %s7, 96
  %v1419 = vld [vmem:[%s1418] sm:$0xff]
  %v1420 = vld [vmem:[%s1418 + $0x8] sm:$0xff]
  %v1421 = vld [vmem:[%s1418 + $0x10] sm:$0xff]
  %v1422 = vld [vmem:[%s1418 + $0x18] sm:$0xff]
  %s1423 = scalar_lea.vmem %s8, 3
  %v1424 = vld [vmem:[%s1423] sm:$0x1]
  %v1426 = vlaneseq
  %v1427 = vshrl.u32 %v1426, 7
  %v1428 = vsub.s32 0, %v1427
  %v1429 = vrot.slane %v1424, %v1428
  %v1432 = vsel %vm152, %v1417, 0
  %1434 = vmatprep.subr.mxu0 0.0
  %1435 = vmatpush1.msra.mxu0 %v1419
  %1436 = vmatprep.subr.mxu0 0.0
  %1437 = vmatpush1.msra.mxu0 %v1420
  %1438 = vmatprep.subr.mxu0 0.0
  %1439 = vmatpush1.msra.mxu0 %v1421
  %1440 = vmatprep.subr.mxu0 0.0
  %1441 = vmatpush1.msra.mxu0 %v1422
  %1442 = vmatprep.subr.mxu0 0.0
  %1443 = vmatpush1.msra.mxu0 0.0
  %1444 = vmatprep.subr.mxu0 0.0
  %1445 = vmatpush1.msra.mxu0 0.0
  %1446 = vmatprep.subr.mxu0 0.0
  %1447 = vmatpush1.msra.mxu0 0.0
  %1448 = vmatprep.subr.mxu0 0.0
  %1449 = vmatpush1.msra.mxu0 0.0
  %1450 = vmatprep.subr.mxu0 0.0
  %1451 = vmatpush1.msra.mxu0 0.0
  %1452 = vmatprep.subr.mxu0 0.0
  %1453 = vmatpush1.msra.mxu0 0.0
  %1454 = vmatprep.subr.mxu0 0.0
  %1455 = vmatpush1.msra.mxu0 0.0
  %1456 = vmatprep.subr.mxu0 0.0
  %1457 = vmatpush1.msra.mxu0 0.0
  %1458 = vmatprep.subr.mxu0 0.0
  %1459 = vmatpush1.msra.mxu0 0.0
  %1460 = vmatprep.subr.mxu0 0.0
  %1461 = vmatpush1.msra.mxu0 0.0
  %1462 = vmatprep.subr.mxu0 0.0
  %1463 = vmatpush1.msra.mxu0 0.0
  %1464 = vmatprep.subr.mxu0 0.0
  %1465 = vmatpush1.msra.mxu0 0.0
  %1466 = vmatprep.subr.mxu0 0.0
  %1467 = vmatpush1.msra.mxu0 0.0
  %1468 = vmatprep.subr.mxu0 0.0
  %1469 = vmatpush1.msra.mxu0 0.0
  %1470 = vmatprep.subr.mxu0 0.0
  %1471 = vmatpush1.msra.mxu0 0.0
  %1472 = vmatprep.subr.mxu0 0.0
  %1473 = vmatpush1.msra.mxu0 0.0
  %1474 = vmatprep.subr.mxu0 0.0
  %1475 = vmatpush1.msra.mxu0 0.0
  %1476 = vmatprep.subr.mxu0 0.0
  %1477 = vmatpush1.msra.mxu0 0.0
  %1478 = vmatprep.subr.mxu0 0.0
  %1479 = vmatpush1.msra.mxu0 0.0
  %1480 = vmatprep.subr.mxu0 0.0
  %1481 = vmatpush1.msra.mxu0 0.0
  %1482 = vmatprep.subr.mxu0 0.0
  %1483 = vmatpush1.msra.mxu0 0.0
  %1484 = vmatprep.subr.mxu0 0.0
  %1485 = vmatpush1.msra.mxu0 0.0
  %1486 = vmatprep.subr.mxu0 0.0
  %1487 = vmatpush1.msra.mxu0 0.0
  %1488 = vmatprep.subr.mxu0 0.0
  %1489 = vmatpush1.msra.mxu0 0.0
  %1490 = vmatprep.subr.mxu0 0.0
  %1491 = vmatpush1.msra.mxu0 0.0
  %1492 = vmatprep.subr.mxu0 0.0
  %1493 = vmatpush1.msra.mxu0 0.0
  %1494 = vmatprep.subr.mxu0 0.0
  %1495 = vmatpush1.msra.mxu0 0.0
  %1496 = vmatprep.subr.mxu0 0.0
  %1497 = vmatpush1.msra.mxu0 0.0
  %1498 = vmatprep.mubr.f32.mxu0 0.0
  %1499 = vmatmul.mubr.f32.gmra.mrb[0].mxu0 %v1432
  %v1500 = vpop.f32.mrb[0].mxu0
  %v1501 = vadd.f32 %v1429, %v1500
  %v1502 = vpop.f32.mrb[0].mxu0
  %1503 = vdwg.mxu0
  %v1504 = vmax.f32 %v1501, 0.0
  %s1505 = scalar_lea.vmem %s9, 384
  %v1506 = vld [vmem:[%s1505] sm:$0xff]
  %v1507 = vld [vmem:[%s1505 + $0x8] sm:$0xff]
  %v1508 = vld [vmem:[%s1505 + $0x10] sm:$0xff]
  %v1509 = vld [vmem:[%s1505 + $0x18] sm:$0xff]
  %v1510 = vld [vmem:[%s1505 + $0x20] sm:$0xff]
  %v1511 = vld [vmem:[%s1505 + $0x28] sm:$0xff]
  %v1512 = vld [vmem:[%s1505 + $0x30] sm:$0xff]
  %v1513 = vld [vmem:[%s1505 + $0x38] sm:$0xff]
  %v1514 = vld [vmem:[%s1505 + $0x40] sm:$0xff]
  %v1515 = vld [vmem:[%s1505 + $0x48] sm:$0xff]
  %v1516 = vld [vmem:[%s1505 + $0x50] sm:$0xff]
  %v1517 = vld [vmem:[%s1505 + $0x58] sm:$0xff]
  %v1518 = vld [vmem:[%s1505 + $0x60] sm:$0xff]
  %v1519 = vld [vmem:[%s1505 + $0x68] sm:$0xff]
  %v1520 = vld [vmem:[%s1505 + $0x70] sm:$0xff]
  %v1521 = vld [vmem:[%s1505 + $0x78] sm:$0xff]
  %s1522 = scalar_lea.vmem %s10, 3
  %v1523 = vld [vmem:[%s1522] sm:$0x1]
  %v1525 = vlaneseq
  %v1526 = vshrl.u32 %v1525, 7
  %v1527 = vsub.s32 0, %v1526
  %v1528 = vrot.slane %v1523, %v1527
  %1530 = vmatprep.subr.mxu0 0.0
  %1531 = vmatpush1.msra.mxu0 %v1506
  %1532 = vmatprep.subr.mxu0 0.0
  %1533 = vmatpush1.msra.mxu0 %v1507
  %1534 = vmatprep.subr.mxu0 0.0
  %1535 = vmatpush1.msra.mxu0 %v1508
  %1536 = vmatprep.subr.mxu0 0.0
  %1537 = vmatpush1.msra.mxu0 %v1509
  %1538 = vmatprep.subr.mxu0 0.0
  %1539 = vmatpush1.msra.mxu0 %v1510
  %1540 = vmatprep.subr.mxu0 0.0
  %1541 = vmatpush1.msra.mxu0 %v1511
  %1542 = vmatprep.subr.mxu0 0.0
  %1543 = vmatpush1.msra.mxu0 %v1512
  %1544 = vmatprep.subr.mxu0 0.0
  %1545 = vmatpush1.msra.mxu0 %v1513
  %1546 = vmatprep.subr.mxu0 0.0
  %1547 = vmatpush1.msra.mxu0 %v1514
  %1548 = vmatprep.subr.mxu0 0.0
  %1549 = vmatpush1.msra.mxu0 %v1515
  %1550 = vmatprep.subr.mxu0 0.0
  %1551 = vmatpush1.msra.mxu0 %v1516
  %1552 = vmatprep.subr.mxu0 0.0
  %1553 = vmatpush1.msra.mxu0 %v1517
  %1554 = vmatprep.subr.mxu0 0.0
  %1555 = vmatpush1.msra.mxu0 %v1518
  %1556 = vmatprep.subr.mxu0 0.0
  %1557 = vmatpush1.msra.mxu0 %v1519
  %1558 = vmatprep.subr.mxu0 0.0
  %1559 = vmatpush1.msra.mxu0 %v1520
  %1560 = vmatprep.subr.mxu0 0.0
  %1561 = vmatpush1.msra.mxu0 %v1521
  %1562 = vmatprep.subr.mxu0 0.0
  %1563 = vmatpush1.msra.mxu0 0.0
  %1564 = vmatprep.subr.mxu0 0.0
  %1565 = vmatpush1.msra.mxu0 0.0
  %1566 = vmatprep.subr.mxu0 0.0
  %1567 = vmatpush1.msra.mxu0 0.0
  %1568 = vmatprep.subr.mxu0 0.0
  %1569 = vmatpush1.msra.mxu0 0.0
  %1570 = vmatprep.subr.mxu0 0.0
  %1571 = vmatpush1.msra.mxu0 0.0
  %1572 = vmatprep.subr.mxu0 0.0
  %1573 = vmatpush1.msra.mxu0 0.0
  %1574 = vmatprep.subr.mxu0 0.0
  %1575 = vmatpush1.msra.mxu0 0.0
  %1576 = vmatprep.subr.mxu0 0.0
  %1577 = vmatpush1.msra.mxu0 0.0
  %1578 = vmatprep.subr.mxu0 0.0
  %1579 = vmatpush1.msra.mxu0 0.0
  %1580 = vmatprep.subr.mxu0 0.0
  %1581 = vmatpush1.msra.mxu0 0.0
  %1582 = vmatprep.subr.mxu0 0.0
  %1583 = vmatpush1.msra.mxu0 0.0
  %1584 = vmatprep.subr.mxu0 0.0
  %1585 = vmatpush1.msra.mxu0 0.0
  %1586 = vmatprep.subr.mxu0 0.0
  %1587 = vmatpush1.msra.mxu0 0.0
  %1588 = vmatprep.subr.mxu0 0.0
  %1589 = vmatpush1.msra.mxu0 0.0
  %1590 = vmatprep.subr.mxu0 0.0
  %1591 = vmatpush1.msra.mxu0 0.0
  %1592 = vmatprep.subr.mxu0 0.0
  %1593 = vmatpush1.msra.mxu0 0.0
  %1594 = vmatprep.mubr.f32.mxu0 0.0
  %1595 = vmatmul.mubr.f32.gmra.mrb[0].mxu0 %v1504
  %v1596 = vpop.f32.mrb[0].mxu0
  %v1597 = vadd.f32 %v1528, %v1596
  %v1598 = vpop.f32.mrb[0].mxu0
  %1599 = vdwg.mxu0
  %v1600 = vadd.f32 %v1417, %v1597
  %s1601 = scalar_lea.vmem %s11, 3
  %v1602 = vld [vmem:[%s1601] sm:$0x1]
  %s1603 = scalar_lea.vmem %s12, 3
  %v1604 = vld [vmem:[%s1603] sm:$0x1]
  %v1605 = vsel %vm152, %v1600, 0.0
  %1606 = vadd.xlane.f32.xlu0 %v1605
  %v1607 = vpop.xlane.xlu0 %1606
  %v1608 = vmul.f32 %v1607, %v232
  %v1609 = vsub.f32 %v1600, %v1608
  %v1610 = vmul.f32 %v1609, %v1609
  %v1611 = vsel %vm152, %v1610, 0.0
  %1612 = vadd.xlane.f32.xlu0 %v1611
  %v1613 = vpop.xlane.xlu0 %1612
  %v1614 = vmul.f32 %v1613, %v232
  %v1615 = vadd.f32 %v1614, 1e-05
  %v1616 = vrsqrt.pop %v1615
  %v1617 = vmul.f32 %v1609, %v1616
  %v1619 = vlaneseq
  %v1620 = vshrl.u32 %v1619, 7
  %v1621 = vsub.s32 0, %v1620
  %v1622 = vrot.slane %v1602, %v1621
  %v1624 = vmul.f32 %v1617, %v1622
  %v1626 = vlaneseq
  %v1627 = vshrl.u32 %v1626, 7
  %v1628 = vsub.s32 0, %v1627
  %v1629 = vrot.slane %v1604, %v1628
  %v1631 = vadd.f32 %v1624, %v1629
  %s1632 = scalar_lea.vmem %s13, 32
  %v1633 = vld [vmem:[%s1632] sm:$0xff]
  %v1634 = vld [vmem:[%s1632 + $0x8] sm:$0xff]
  %v1635 = vld [vmem:[%s1632 + $0x10] sm:$0xff]
  %v1636 = vld [vmem:[%s1632 + $0x18] sm:$0xff]
  %s1637 = scalar_lea.vmem %s14, 1
  %v1638 = vld [vmem:[%s1637] sm:$0x1]
  %v1640 = vlaneseq
  %v1641 = vshrl.u32 %v1640, 7
  %v1642 = vsub.s32 0, %v1641
  %v1643 = vrot.slane %v1638, %v1642
  %v1646 = vsel %vm152, %v1631, 0
  %1648 = vmatprep.subr.mxu0 0.0
  %1649 = vmatpush1.msra.mxu0 %v1633
  %1650 = vmatprep.subr.mxu0 0.0
  %1651 = vmatpush1.msra.mxu0 %v1634
  %1652 = vmatprep.subr.mxu0 0.0
  %1653 = vmatpush1.msra.mxu0 %v1635
  %1654 = vmatprep.subr.mxu0 0.0
  %1655 = vmatpush1.msra.mxu0 %v1636
  %1656 = vmatprep.subr.mxu0 0.0
  %1657 = vmatpush1.msra.mxu0 0.0
  %1658 = vmatprep.subr.mxu0 0.0
  %1659 = vmatpush1.msra.mxu0 0.0
  %1660 = vmatprep.subr.mxu0 0.0
  %1661 = vmatpush1.msra.mxu0 0.0
  %1662 = vmatprep.subr.mxu0 0.0
  %1663 = vmatpush1.msra.mxu0 0.0
  %1664 = vmatprep.subr.mxu0 0.0
  %1665 = vmatpush1.msra.mxu0 0.0
  %1666 = vmatprep.subr.mxu0 0.0
  %1667 = vmatpush1.msra.mxu0 0.0
  %1668 = vmatprep.subr.mxu0 0.0
  %1669 = vmatpush1.msra.mxu0 0.0
  %1670 = vmatprep.subr.mxu0 0.0
  %1671 = vmatpush1.msra.mxu0 0.0
  %1672 = vmatprep.subr.mxu0 0.0
  %1673 = vmatpush1.msra.mxu0 0.0
  %1674 = vmatprep.subr.mxu0 0.0
  %1675 = vmatpush1.msra.mxu0 0.0
  %1676 = vmatprep.subr.mxu0 0.0
  %1677 = vmatpush1.msra.mxu0 0.0
  %1678 = vmatprep.subr.mxu0 0.0
  %1679 = vmatpush1.msra.mxu0 0.0
  %1680 = vmatprep.subr.mxu0 0.0
  %1681 = vmatpush1.msra.mxu0 0.0
  %1682 = vmatprep.subr.mxu0 0.0
  %1683 = vmatpush1.msra.mxu0 0.0
  %1684 = vmatprep.subr.mxu0 0.0
  %1685 = vmatpush1.msra.mxu0 0.0
  %1686 = vmatprep.subr.mxu0 0.0
  %1687 = vmatpush1.msra.mxu0 0.0
  %1688 = vmatprep.subr.mxu0 0.0
  %1689 = vmatpush1.msra.mxu0 0.0
  %1690 = vmatprep.subr.mxu0 0.0
  %1691 = vmatpush1.msra.mxu0 0.0
  %1692 = vmatprep.subr.mxu0 0.0
  %1693 = vmatpush1.msra.mxu0 0.0
  %1694 = vmatprep.subr.mxu0 0.0
  %1695 = vmatpush1.msra.mxu0 0.0
  %1696 = vmatprep.subr.mxu0 0.0
  %1697 = vmatpush1.msra.mxu0 0.0
  %1698 = vmatprep.subr.mxu0 0.0
  %1699 = vmatpush1.msra.mxu0 0.0
  %1700 = vmatprep.subr.mxu0 0.0
  %1701 = vmatpush1.msra.mxu0 0.0
  %1702 = vmatprep.subr.mxu0 0.0
  %1703 = vmatpush1.msra.mxu0 0.0
  %1704 = vmatprep.subr.mxu0 0.0
  %1705 = vmatpush1.msra.mxu0 0.0
  %1706 = vmatprep.subr.mxu0 0.0
  %1707 = vmatpush1.msra.mxu0 0.0
  %1708 = vmatprep.subr.mxu0 0.0
  %1709 = vmatpush1.msra.mxu0 0.0
  %1710 = vmatprep.subr.mxu0 0.0
  %1711 = vmatpush1.msra.mxu0 0.0
  %1712 = vmatprep.mubr.f32.mxu0 0.0
  %1713 = vmatmul.mubr.f32.gmra.mrb[0].mxu0 %v1646
  %v1714 = vpop.f32.mrb[0].mxu0
  %v1715 = vadd.f32 %v1643, %v1714
  %v1716 = vpop.f32.mrb[0].mxu0
  %1717 = vdwg.mxu0
  %1719 = vrot.lane.b32.xlu0 %v1715, 1
  %v1720 = vpop.permute.xlu0 %1719
  %vm1722 = vcmask 7168
  %v1723 = vsel %vm1722, %v878, %v1720
  %vm1724 = vcmask 15360
  %1725 = vst.msk [vmem:[%s15] sm:$0xff] %vm1724, %v1723
  // Predicated region
  $region62: #{tpu_custom_call.1} parent=0 // pred_check
    _
  $region63: #{tpu_custom_call.1} parent=0 // pred_check_branch
    %1727 = sbr.rel (0) target = $region65
  $region64: #{tpu_custom_call.1} parent=0 // pred_region
    _
  $region65: #{tpu_custom_call.1} parent=0 // pred_fallthru
    _
  // Predicated region
  $region66: #{tpu_custom_call.1} parent=0 // pred_check
    _
  $region67: #{tpu_custom_call.1} parent=0 // pred_check_branch
    %1729 = sbr.rel (0) target = $region69
  $region68: #{tpu_custom_call.1} parent=0 // pred_region
    _
  $region69: #{tpu_custom_call.1} parent=0 // pred_fallthru
    _

</llo_original>
